<compile_context>
chip_gen: v7x
topology: tpu7x:2x2x1
jax: 0.10.0
libtpu: 0.0.40
codegen_flags: <defaults>
</compile_context>

<pallas_src>
import functools

import jax
import jax.numpy as jnp
from jax.experimental import pallas as pl
from jax.experimental.pallas import tpu as pltpu


# ----------------------------------------------------------------------------
# Shifted DFT operators (fftshift / ifftshift permutations folded in)
# ----------------------------------------------------------------------------
def _dft_matrix(n, inverse):
    k = jnp.arange(n)
    sign = 1.0 if inverse else -1.0
    ang = sign * 2.0 * jnp.pi * jnp.outer(k, k).astype(jnp.float32) / n
    f = (jnp.cos(ang) + 1j * jnp.sin(ang)).astype(jnp.complex64)
    if inverse:
        f = f / n
    return f


def _row_op_matrix(n, inverse):
    # A such that  A @ u == fftshift((i)fft(ifftshift(u)))  for a column vector u.
    f = _dft_matrix(n, inverse)
    eye = jnp.eye(n, dtype=jnp.complex64)
    a = jnp.fft.fftshift(f @ jnp.fft.ifftshift(eye, axes=0), axes=0)
    return jnp.real(a).astype(jnp.float32), jnp.imag(a).astype(jnp.float32)


def _col_op_matrix(n, inverse):
    # B such that  u @ B == fftshift((i)fft(ifftshift(u)))  for a row vector u.
    f = _dft_matrix(n, inverse)
    eye = jnp.eye(n, dtype=jnp.complex64)
    b = jnp.fft.fftshift(jnp.fft.ifftshift(eye, axes=1) @ f.T, axes=1)
    return jnp.real(b).astype(jnp.float32), jnp.imag(b).astype(jnp.float32)


def _pack3(mr, mi, dtype):
    # [real, imag, real+imag] on a leading axis; sum computed in f32, shipped
    # in the MXU operand dtype (bf16 on the fast path).
    return jnp.stack([mr, mi, mr + mi], axis=0).astype(dtype)


# ----------------------------------------------------------------------------
# Generation-aware VMEM model / plane-batch choice
# ----------------------------------------------------------------------------
_V7X_LIKE_VMEM = 72 * 1024 * 1024   # <= this capacity -> treat as v7x (64 MiB/TC)


def _vmem_capacity_bytes():
    try:
        cap = getattr(pltpu.get_tpu_info(), "vmem_capacity_bytes", None)
        if cap:
            return int(cap)
    except Exception:
        pass
    return 64 * 1024 * 1024          # conservative fallback (v7x-sized)


def _choose_plane_batch(bc, h, w, const_bytes, vmem_cap):
    """Largest divisor of bc whose per-step VMEM footprint fits the budget."""
    if vmem_cap <= _V7X_LIKE_VMEM:                 # v7x: 64 MiB physical
        budget, prefer_two_steps = 28 * 1024 * 1024, True
    else:                                          # v5e / v6e: 128 MiB physical
        budget, prefer_two_steps = 60 * 1024 * 1024, False
    # ~32 f32/pixel/plane: double-buffered x/og/out blocks (24) + in-kernel
    # forward temporaries + mask + headroom (per-review corrected model).
    per_plane = 32 * h * w * 4
    pmax = max(1, (budget - const_bytes) // per_plane)
    pmax = int(min(pmax, 16))                      # static-unroll / code-size cap
    divisors = [d for d in range(1, bc + 1) if bc % d == 0 and d <= pmax]
    if not divisors:
        return 1
    best = max(divisors)
    if prefer_two_steps and bc // best < 2:        # keep both v7x TensorCores busy
        two_step = [d for d in divisors if bc // d >= 2]
        if two_step:
            best = max(two_step)
    return best


def _resident_spec(block_shape, index_map):
    # Constant-index blocks are DMA'd once; Buffered(1) drops their second
    # (pipelining) buffer.  Fall back cleanly if this BlockSpec has no
    # pipeline_mode kwarg.
    try:
        return pl.BlockSpec(block_shape, index_map,
                            pipeline_mode=pl.Buffered(buffer_count=1))
    except Exception:
        return pl.BlockSpec(block_shape, index_map)


# ----------------------------------------------------------------------------
# Kernel: shifted FFT2 -> k-space data consistency -> shifted IFFT2
# ----------------------------------------------------------------------------
def _dc_kernel(x_ref, og_ref, mask_ref,
               fb_ref, fa_ref, im_ref, in_ref,
               out_ref,
               *, mask_shared, mxu_dtype):
    P, _, H, W = x_ref.shape

    def mm(a, b):
        # MXU matmul: operands in the MXU dtype (bf16 fast path), f32 accumulate.
        return jnp.dot(a.astype(mxu_dtype), b.astype(mxu_dtype),
                       preferred_element_type=jnp.float32)

    def cmul_right(dr, di, br, bi, bs):
        # (dr + i*di) @ (br + i*bi), Gauss 3-multiply; bs = br + bi precomputed.
        t1 = mm(dr, br)
        t2 = mm(di, bi)
        t3 = mm(dr + di, bs)
        return t1 - t2, t3 - t1 - t2

    def cmul_left(ar, ai, asum, dr, di):
        # (ar + i*ai) @ (dr + i*di), Gauss 3-multiply; asum = ar + ai precomputed.
        t1 = mm(ar, dr)
        t2 = mm(ai, di)
        t3 = mm(asum, dr + di)
        return t1 - t2, t3 - t1 - t2

    # Constant operator slices, loaded once per grid step (not per plane).
    fbr, fbi, fbs = fb_ref[0], fb_ref[1], fb_ref[2]   # forward, right (W, W)
    far, fai, fas = fa_ref[0], fa_ref[1], fa_ref[2]   # forward, left  (H, H)
    imr, imi, ims = im_ref[0], im_ref[1], im_ref[2]   # inverse, left  (H, H)
    inr, ini, ins = in_ref[0], in_ref[1], in_ref[2]   # inverse, right (W, W)

    # Hoisted (1 - mask): JAX does not CSE broadcasts, keep it out of the loop.
    if mask_shared:
        keep_shared = 1.0 - mask_ref[0]

    # ---- forward, W axis: all P planes as one (P*H, W) @ (W, W) matmul ----
    xr_f = x_ref[:, 0, :, :].reshape(P * H, W)
    xi_f = x_ref[:, 1, :, :].reshape(P * H, W)
    tr_f, ti_f = cmul_right(xr_f, xi_f, fbr, fbi, fbs)
    tr = tr_f.reshape(P, H, W)
    ti = ti_f.reshape(P, H, W)

    # ---- per plane: forward H axis, data consistency, inverse H + W axes ----
    # The inverse W-side product runs per plane and writes straight to out_ref:
    # no VMEM scratch and no store/reload pass over the intermediate.
    for p in range(P):                                # static unroll, P small
        kr, ki = cmul_left(far, fai, fas, tr[p], ti[p])
        keep = keep_shared if mask_shared else (1.0 - mask_ref[p])
        mr = og_ref[p, 0, :, :] + kr * keep
        mi = og_ref[p, 1, :, :] + ki * keep
        ur, ui = cmul_left(imr, imi, ims, mr, mi)
        yr, yi = cmul_right(ur, ui, inr, ini, ins)
        out_ref[p, 0, :, :] = yr
        out_ref[p, 1, :, :] = yi


# ----------------------------------------------------------------------------
# Wrapper
# ----------------------------------------------------------------------------
@functools.partial(jax.jit, static_argnames=("use_bf16",))
def data_consistency_layer(x, og_kspace, mask, use_bf16=True):
    """Pallas port of DataConsistencyLayer.forward.

    x:         (B, 2C, H, W) float32 — interleaved real/imag channels (NCHW)
    og_kspace: (B,  C, H, W) complex64
    mask:      broadcastable to (B, C, H, W), real
    use_bf16:  bf16 MXU operands (v6e/v7x fast path); False = full-f32 matmuls.
    returns:   (B, 2C, H, W) float32 — interleaved real/imag channels
    """
    b, c2, h, w = x.shape
    c = c2 // 2
    bc = b * c

    mxu_dtype = jnp.bfloat16 if use_bf16 else jnp.float32
    const_itemsize = jnp.dtype(mxu_dtype).itemsize

    # Free reshapes: real/imag channel pairs are contiguous -> (bc, 2, h, w).
    x_ri = x.astype(jnp.float32).reshape(b, c, 2, h, w).reshape(bc, 2, h, w)

    og = og_kspace.reshape(bc, h, w)
    og_ri = jnp.stack([jnp.real(og), jnp.imag(og)], axis=1).astype(jnp.float32)

    m = jnp.asarray(mask, jnp.float32)
    lead = m.shape[:-2] if m.ndim >= 2 else ()
    mask_shared = all(int(d) == 1 for d in lead)
    if mask_shared:
        m_arr = jnp.broadcast_to(m, tuple(lead) + (h, w)).reshape(1, h, w)
    else:
        # TODO(synk): masks that are only batch- or coil-shared (e.g. (B,1,H,W))
        # fall into this full broadcast; an index_map over the original shape
        # would avoid materializing bc copies in HBM.
        m_arr = jnp.broadcast_to(m, (b, c, h, w)).reshape(bc, h, w)

    # Constant shifted-DFT operators, packed (3, n, n) = [real, imag, real+imag].
    fa = _pack3(*_row_op_matrix(h, inverse=False), mxu_dtype)   # forward, left  (H)
    fb = _pack3(*_col_op_matrix(w, inverse=False), mxu_dtype)   # forward, right (W)
    im_ = _pack3(*_row_op_matrix(h, inverse=True), mxu_dtype)   # inverse, left
    in_ = _pack3(*_col_op_matrix(w, inverse=True), mxu_dtype)   # inverse, right

    vmem_cap = _vmem_capacity_bytes()
    const_bytes = 6 * (h * h + w * w) * const_itemsize * 2      # conservative
    p = _choose_plane_batch(bc, h, w, const_bytes, vmem_cap)
    grid = (bc // p,)
    vmem_limit = (56 if vmem_cap <= _V7X_LIKE_VMEM else 100) * 1024 * 1024

    plane_spec = pl.BlockSpec((p, 2, h, w), lambda i: (i, 0, 0, 0))
    if mask_shared:
        mask_spec = _resident_spec((1, h, w), lambda i: (0, 0, 0))
    else:
        mask_spec = pl.BlockSpec((p, h, w), lambda i: (i, 0, 0))
    hmat_spec = _resident_spec((3, h, h), lambda i: (0, 0, 0))   # DMA'd once
    wmat_spec = _resident_spec((3, w, w), lambda i: (0, 0, 0))   # DMA'd once

    cost = pl.CostEstimate(
        flops=12 * bc * h * w * (h + w),                 # 4 Gauss complex matmuls
        bytes_accessed=24 * bc * h * w + m_arr.size * 4
                       + 6 * (h * h + w * w) * const_itemsize,
        transcendentals=0)

    kernel = functools.partial(_dc_kernel, mask_shared=mask_shared,
                               mxu_dtype=mxu_dtype)

    out = pl.pallas_call(
        kernel,
        out_shape=jax.ShapeDtypeStruct((bc, 2, h, w), jnp.float32),
        grid=grid,
        in_specs=[plane_spec, plane_spec, mask_spec,
                  wmat_spec, hmat_spec, hmat_spec, wmat_spec],
        out_specs=plane_spec,
        compiler_params=pltpu.CompilerParams(
            dimension_semantics=("parallel",),
            vmem_limit_bytes=vmem_limit),
        cost_estimate=cost,
    )(x_ri, og_ri, m_arr, fb, fa, im_, in_)

    # Free reshape back to interleaved real/imag channels.
    return out.reshape(b, c, 2, h, w).reshape(b, c2, h, w)


# ----------------------------------------------------------------------------
# Pure-JAX reference (mirrors the PyTorch forward exactly)
# ----------------------------------------------------------------------------
def _reference(x, og_kspace, mask):
    xc = x[:, ::2] + 1j * x[:, 1::2]
    k = og_kspace + jnp.fft.fftshift(
        jnp.fft.fft2(jnp.fft.ifftshift(xc, axes=(-2, -1))), axes=(-2, -1)
    ) * (1.0 - mask)
    mx = jnp.fft.fftshift(
        jnp.fft.ifft2(jnp.fft.ifftshift(k, axes=(-2, -1))), axes=(-2, -1)
    )
    b, c, h, w = mx.shape
    return jnp.stack([jnp.real(mx), jnp.imag(mx)], axis=2).reshape(
        b, 2 * c, h, w).astype(jnp.float32)


if __name__ == "__main__":
    key = jax.random.PRNGKey(0)
    k1, k2, k3, k4 = jax.random.split(key, 4)

    B, C, H, W = 2, 2, 16, 16              # x has 2*C = 4 channels (NCHW)
    x = jax.random.normal(k1, (B, 2 * C, H, W), dtype=jnp.float32)
    og_kspace = (jax.random.normal(k2, (B, C, H, W), dtype=jnp.float32)
                 + 1j * jax.random.normal(k3, (B, C, H, W), dtype=jnp.float32)
                 ).astype(jnp.complex64)
    mask_full = (jax.random.uniform(k4, (B, C, H, W)) > 0.5).astype(jnp.float32)
    mask_11 = mask_full[:1, :1]            # (1, 1, H, W): shared across batch/coil

    def rel_err(a, b):
        return float(jnp.max(jnp.abs(a - b)) / (jnp.max(jnp.abs(b)) + 1e-6))

    # 1) Production path: bf16 MXU operands, fully shared mask.
    out = jax.block_until_ready(data_consistency_layer(x, og_kspace, mask_11))
    ref = _reference(x, og_kspace, mask_11)
    assert out.shape == (B, 2 * C, H, W) and out.dtype == jnp.float32
    assert rel_err(out, ref) < 5e-2, f"bf16/shared-mask mismatch: {rel_err(out, ref)}"

    # 2) bf16 path with a per-(batch, coil) mask (non-shared BlockSpec path).
    out2 = jax.block_until_ready(data_consistency_layer(x, og_kspace, mask_full))
    ref2 = _reference(x, og_kspace, mask_full)
    assert rel_err(out2, ref2) < 5e-2, f"bf16/full-mask mismatch: {rel_err(out2, ref2)}"

    # 3) Full-f32 MXU fallback path.
    out3 = jax.block_until_ready(
        data_consistency_layer(x, og_kspace, mask_full, use_bf16=False))
    assert jnp.allclose(out3, ref2, rtol=2e-2, atol=2e-2), "f32 mismatch vs reference"

    print("KERNEL_OK")
</pallas_src>

<mosaic_0001>
module attributes {stable_mosaic.version = 11 : i64} {
  func.func @_dc_kernel(%arg0: i32, %arg1: memref<2x2x16x16xf32, #tpu.memory_space<vmem>>, %arg2: memref<2x2x16x16xf32, #tpu.memory_space<vmem>>, %arg3: memref<1x16x16xf32, #tpu.memory_space<vmem>>, %arg4: memref<3x16x16xbf16, #tpu.memory_space<vmem>>, %arg5: memref<3x16x16xbf16, #tpu.memory_space<vmem>>, %arg6: memref<3x16x16xbf16, #tpu.memory_space<vmem>>, %arg7: memref<3x16x16xbf16, #tpu.memory_space<vmem>>, %arg8: memref<2x2x16x16xf32, #tpu.memory_space<vmem>>) attributes {dimension_semantics = [#tpu.dimension_semantics<parallel>], iteration_bounds = array<i64: 2>, scalar_prefetch = 0 : i64, scratch_operands = 0 : i64, tpu.core_type = #tpu.core_type<tc>, window_params = [{transform_indices = @transform_0, window_bounds = array<i64: 2, 2, 16, 16>}, {transform_indices = @transform_1, window_bounds = array<i64: 2, 2, 16, 16>}, {pipeline_mode = #tpu.pipeline_mode<synchronous>, transform_indices = @transform_2, window_bounds = array<i64: 1, 16, 16>}, {pipeline_mode = #tpu.pipeline_mode<synchronous>, transform_indices = @transform_3, window_bounds = array<i64: 3, 16, 16>}, {pipeline_mode = #tpu.pipeline_mode<synchronous>, transform_indices = @transform_4, window_bounds = array<i64: 3, 16, 16>}, {pipeline_mode = #tpu.pipeline_mode<synchronous>, transform_indices = @transform_5, window_bounds = array<i64: 3, 16, 16>}, {pipeline_mode = #tpu.pipeline_mode<synchronous>, transform_indices = @transform_6, window_bounds = array<i64: 3, 16, 16>}, {transform_indices = @transform_7, window_bounds = array<i64: 2, 2, 16, 16>}]} {
    %c0 = arith.constant 0 : index
    %c0_0 = arith.constant 0 : index
    %c0_1 = arith.constant 0 : index
    %0 = vector.load %arg4[%c0, %c0_0, %c0_1] : memref<3x16x16xbf16, #tpu.memory_space<vmem>>, vector<1x16x16xbf16>
    %1 = vector.shape_cast %0 : vector<1x16x16xbf16> to vector<16x16xbf16>
    %c1 = arith.constant 1 : index
    %c0_2 = arith.constant 0 : index
    %c0_3 = arith.constant 0 : index
    %2 = vector.load %arg4[%c1, %c0_2, %c0_3] : memref<3x16x16xbf16, #tpu.memory_space<vmem>>, vector<1x16x16xbf16>
    %3 = vector.shape_cast %2 : vector<1x16x16xbf16> to vector<16x16xbf16>
    %c2 = arith.constant 2 : index
    %c0_4 = arith.constant 0 : index
    %c0_5 = arith.constant 0 : index
    %4 = vector.load %arg4[%c2, %c0_4, %c0_5] : memref<3x16x16xbf16, #tpu.memory_space<vmem>>, vector<1x16x16xbf16>
    %5 = vector.shape_cast %4 : vector<1x16x16xbf16> to vector<16x16xbf16>
    %c0_6 = arith.constant 0 : index
    %c0_7 = arith.constant 0 : index
    %c0_8 = arith.constant 0 : index
    %6 = vector.load %arg5[%c0_6, %c0_7, %c0_8] : memref<3x16x16xbf16, #tpu.memory_space<vmem>>, vector<1x16x16xbf16>
    %7 = vector.shape_cast %6 : vector<1x16x16xbf16> to vector<16x16xbf16>
    %c1_9 = arith.constant 1 : index
    %c0_10 = arith.constant 0 : index
    %c0_11 = arith.constant 0 : index
    %8 = vector.load %arg5[%c1_9, %c0_10, %c0_11] : memref<3x16x16xbf16, #tpu.memory_space<vmem>>, vector<1x16x16xbf16>
    %9 = vector.shape_cast %8 : vector<1x16x16xbf16> to vector<16x16xbf16>
    %c2_12 = arith.constant 2 : index
    %c0_13 = arith.constant 0 : index
    %c0_14 = arith.constant 0 : index
    %10 = vector.load %arg5[%c2_12, %c0_13, %c0_14] : memref<3x16x16xbf16, #tpu.memory_space<vmem>>, vector<1x16x16xbf16>
    %11 = vector.shape_cast %10 : vector<1x16x16xbf16> to vector<16x16xbf16>
    %c0_15 = arith.constant 0 : index
    %c0_16 = arith.constant 0 : index
    %c0_17 = arith.constant 0 : index
    %12 = vector.load %arg6[%c0_15, %c0_16, %c0_17] : memref<3x16x16xbf16, #tpu.memory_space<vmem>>, vector<1x16x16xbf16>
    %13 = vector.shape_cast %12 : vector<1x16x16xbf16> to vector<16x16xbf16>
    %c1_18 = arith.constant 1 : index
    %c0_19 = arith.constant 0 : index
    %c0_20 = arith.constant 0 : index
    %14 = vector.load %arg6[%c1_18, %c0_19, %c0_20] : memref<3x16x16xbf16, #tpu.memory_space<vmem>>, vector<1x16x16xbf16>
    %15 = vector.shape_cast %14 : vector<1x16x16xbf16> to vector<16x16xbf16>
    %c2_21 = arith.constant 2 : index
    %c0_22 = arith.constant 0 : index
    %c0_23 = arith.constant 0 : index
    %16 = vector.load %arg6[%c2_21, %c0_22, %c0_23] : memref<3x16x16xbf16, #tpu.memory_space<vmem>>, vector<1x16x16xbf16>
    %17 = vector.shape_cast %16 : vector<1x16x16xbf16> to vector<16x16xbf16>
    %c0_24 = arith.constant 0 : index
    %c0_25 = arith.constant 0 : index
    %c0_26 = arith.constant 0 : index
    %18 = vector.load %arg7[%c0_24, %c0_25, %c0_26] : memref<3x16x16xbf16, #tpu.memory_space<vmem>>, vector<1x16x16xbf16>
    %19 = vector.shape_cast %18 : vector<1x16x16xbf16> to vector<16x16xbf16>
    %c1_27 = arith.constant 1 : index
    %c0_28 = arith.constant 0 : index
    %c0_29 = arith.constant 0 : index
    %20 = vector.load %arg7[%c1_27, %c0_28, %c0_29] : memref<3x16x16xbf16, #tpu.memory_space<vmem>>, vector<1x16x16xbf16>
    %21 = vector.shape_cast %20 : vector<1x16x16xbf16> to vector<16x16xbf16>
    %c2_30 = arith.constant 2 : index
    %c0_31 = arith.constant 0 : index
    %c0_32 = arith.constant 0 : index
    %22 = vector.load %arg7[%c2_30, %c0_31, %c0_32] : memref<3x16x16xbf16, #tpu.memory_space<vmem>>, vector<1x16x16xbf16>
    %23 = vector.shape_cast %22 : vector<1x16x16xbf16> to vector<16x16xbf16>
    %c0_33 = arith.constant 0 : index
    %c0_34 = arith.constant 0 : index
    %c0_35 = arith.constant 0 : index
    %24 = vector.load %arg3[%c0_33, %c0_34, %c0_35] : memref<1x16x16xf32, #tpu.memory_space<vmem>>, vector<1x16x16xf32>
    %25 = vector.shape_cast %24 : vector<1x16x16xf32> to vector<16x16xf32>
    %cst = arith.constant 1.000000e+00 : f32
    %26 = vector.broadcast %cst : f32 to vector<16x16xf32>
    %27 = arith.subf %26, %25 : vector<16x16xf32>
    %c0_36 = arith.constant 0 : index
    %c0_37 = arith.constant 0 : index
    %c0_38 = arith.constant 0 : index
    %c0_39 = arith.constant 0 : index
    %28 = vector.load %arg1[%c0_36, %c0_37, %c0_38, %c0_39] : memref<2x2x16x16xf32, #tpu.memory_space<vmem>>, vector<2x1x16x16xf32>
    %29 = vector.shape_cast %28 : vector<2x1x16x16xf32> to vector<2x16x16xf32>
    %30 = vector.shape_cast %29 : vector<2x16x16xf32> to vector<32x16xf32>
    %c0_40 = arith.constant 0 : index
    %c1_41 = arith.constant 1 : index
    %c0_42 = arith.constant 0 : index
    %c0_43 = arith.constant 0 : index
    %31 = vector.load %arg1[%c0_40, %c1_41, %c0_42, %c0_43] : memref<2x2x16x16xf32, #tpu.memory_space<vmem>>, vector<2x1x16x16xf32>
    %32 = vector.shape_cast %31 : vector<2x1x16x16xf32> to vector<2x16x16xf32>
    %33 = vector.shape_cast %32 : vector<2x16x16xf32> to vector<32x16xf32>
    %34 = arith.truncf %30 : vector<32x16xf32> to vector<32x16xbf16>
    %cst_44 = arith.constant dense<0.000000e+00> : vector<32x16xf32>
    %35 = tpu.matmul %34, %1, %cst_44 {dimension_numbers = #tpu.dot_dimension_numbers<[1], [0], [0], [1], [0, 0, 1, 1], [], []>} : vector<32x16xbf16>, vector<16x16xbf16>, vector<32x16xf32> -> vector<32x16xf32>
    %36 = arith.truncf %33 : vector<32x16xf32> to vector<32x16xbf16>
    %cst_45 = arith.constant dense<0.000000e+00> : vector<32x16xf32>
    %37 = tpu.matmul %36, %3, %cst_45 {dimension_numbers = #tpu.dot_dimension_numbers<[1], [0], [0], [1], [0, 0, 1, 1], [], []>} : vector<32x16xbf16>, vector<16x16xbf16>, vector<32x16xf32> -> vector<32x16xf32>
    %38 = arith.addf %30, %33 : vector<32x16xf32>
    %39 = arith.truncf %38 : vector<32x16xf32> to vector<32x16xbf16>
    %cst_46 = arith.constant dense<0.000000e+00> : vector<32x16xf32>
    %40 = tpu.matmul %39, %5, %cst_46 {dimension_numbers = #tpu.dot_dimension_numbers<[1], [0], [0], [1], [0, 0, 1, 1], [], []>} : vector<32x16xbf16>, vector<16x16xbf16>, vector<32x16xf32> -> vector<32x16xf32>
    %41 = arith.subf %35, %37 : vector<32x16xf32>
    %42 = arith.subf %40, %35 : vector<32x16xf32>
    %43 = arith.subf %42, %37 : vector<32x16xf32>
    %44 = vector.shape_cast %41 : vector<32x16xf32> to vector<2x16x16xf32>
    %45 = vector.shape_cast %43 : vector<32x16xf32> to vector<2x16x16xf32>
    %46 = vector.extract_strided_slice %44 {offsets = [0, 0, 0], sizes = [1, 16, 16], strides = [1, 1, 1]} : vector<2x16x16xf32> to vector<1x16x16xf32>
    %47 = vector.shape_cast %46 : vector<1x16x16xf32> to vector<16x16xf32>
    %48 = vector.extract_strided_slice %45 {offsets = [0, 0, 0], sizes = [1, 16, 16], strides = [1, 1, 1]} : vector<2x16x16xf32> to vector<1x16x16xf32>
    %49 = vector.shape_cast %48 : vector<1x16x16xf32> to vector<16x16xf32>
    %50 = arith.truncf %47 : vector<16x16xf32> to vector<16x16xbf16>
    %cst_47 = arith.constant dense<0.000000e+00> : vector<16x16xf32>
    %51 = tpu.matmul %7, %50, %cst_47 {dimension_numbers = #tpu.dot_dimension_numbers<[1], [0], [0], [1], [0, 0, 1, 1], [], []>} : vector<16x16xbf16>, vector<16x16xbf16>, vector<16x16xf32> -> vector<16x16xf32>
    %52 = arith.truncf %49 : vector<16x16xf32> to vector<16x16xbf16>
    %cst_48 = arith.constant dense<0.000000e+00> : vector<16x16xf32>
    %53 = tpu.matmul %9, %52, %cst_48 {dimension_numbers = #tpu.dot_dimension_numbers<[1], [0], [0], [1], [0, 0, 1, 1], [], []>} : vector<16x16xbf16>, vector<16x16xbf16>, vector<16x16xf32> -> vector<16x16xf32>
    %54 = arith.addf %47, %49 : vector<16x16xf32>
    %55 = arith.truncf %54 : vector<16x16xf32> to vector<16x16xbf16>
    %cst_49 = arith.constant dense<0.000000e+00> : vector<16x16xf32>
    %56 = tpu.matmul %11, %55, %cst_49 {dimension_numbers = #tpu.dot_dimension_numbers<[1], [0], [0], [1], [0, 0, 1, 1], [], []>} : vector<16x16xbf16>, vector<16x16xbf16>, vector<16x16xf32> -> vector<16x16xf32>
    %57 = arith.subf %51, %53 : vector<16x16xf32>
    %58 = arith.subf %56, %51 : vector<16x16xf32>
    %59 = arith.subf %58, %53 : vector<16x16xf32>
    %c0_50 = arith.constant 0 : index
    %c0_51 = arith.constant 0 : index
    %c0_52 = arith.constant 0 : index
    %c0_53 = arith.constant 0 : index
    %60 = vector.load %arg2[%c0_50, %c0_51, %c0_52, %c0_53] : memref<2x2x16x16xf32, #tpu.memory_space<vmem>>, vector<1x1x16x16xf32>
    %61 = vector.shape_cast %60 : vector<1x1x16x16xf32> to vector<16x16xf32>
    %62 = arith.mulf %57, %27 : vector<16x16xf32>
    %63 = arith.addf %61, %62 : vector<16x16xf32>
    %c0_54 = arith.constant 0 : index
    %c1_55 = arith.constant 1 : index
    %c0_56 = arith.constant 0 : index
    %c0_57 = arith.constant 0 : index
    %64 = vector.load %arg2[%c0_54, %c1_55, %c0_56, %c0_57] : memref<2x2x16x16xf32, #tpu.memory_space<vmem>>, vector<1x1x16x16xf32>
    %65 = vector.shape_cast %64 : vector<1x1x16x16xf32> to vector<16x16xf32>
    %66 = arith.mulf %59, %27 : vector<16x16xf32>
    %67 = arith.addf %65, %66 : vector<16x16xf32>
    %68 = arith.truncf %63 : vector<16x16xf32> to vector<16x16xbf16>
    %cst_58 = arith.constant dense<0.000000e+00> : vector<16x16xf32>
    %69 = tpu.matmul %13, %68, %cst_58 {dimension_numbers = #tpu.dot_dimension_numbers<[1], [0], [0], [1], [0, 0, 1, 1], [], []>} : vector<16x16xbf16>, vector<16x16xbf16>, vector<16x16xf32> -> vector<16x16xf32>
    %70 = arith.truncf %67 : vector<16x16xf32> to vector<16x16xbf16>
    %cst_59 = arith.constant dense<0.000000e+00> : vector<16x16xf32>
    %71 = tpu.matmul %15, %70, %cst_59 {dimension_numbers = #tpu.dot_dimension_numbers<[1], [0], [0], [1], [0, 0, 1, 1], [], []>} : vector<16x16xbf16>, vector<16x16xbf16>, vector<16x16xf32> -> vector<16x16xf32>
    %72 = arith.addf %63, %67 : vector<16x16xf32>
    %73 = arith.truncf %72 : vector<16x16xf32> to vector<16x16xbf16>
    %cst_60 = arith.constant dense<0.000000e+00> : vector<16x16xf32>
    %74 = tpu.matmul %17, %73, %cst_60 {dimension_numbers = #tpu.dot_dimension_numbers<[1], [0], [0], [1], [0, 0, 1, 1], [], []>} : vector<16x16xbf16>, vector<16x16xbf16>, vector<16x16xf32> -> vector<16x16xf32>
    %75 = arith.subf %69, %71 : vector<16x16xf32>
    %76 = arith.subf %74, %69 : vector<16x16xf32>
    %77 = arith.subf %76, %71 : vector<16x16xf32>
    %78 = arith.truncf %75 : vector<16x16xf32> to vector<16x16xbf16>
    %cst_61 = arith.constant dense<0.000000e+00> : vector<16x16xf32>
    %79 = tpu.matmul %78, %19, %cst_61 {dimension_numbers = #tpu.dot_dimension_numbers<[1], [0], [0], [1], [0, 0, 1, 1], [], []>} : vector<16x16xbf16>, vector<16x16xbf16>, vector<16x16xf32> -> vector<16x16xf32>
    %80 = arith.truncf %77 : vector<16x16xf32> to vector<16x16xbf16>
    %cst_62 = arith.constant dense<0.000000e+00> : vector<16x16xf32>
    %81 = tpu.matmul %80, %21, %cst_62 {dimension_numbers = #tpu.dot_dimension_numbers<[1], [0], [0], [1], [0, 0, 1, 1], [], []>} : vector<16x16xbf16>, vector<16x16xbf16>, vector<16x16xf32> -> vector<16x16xf32>
    %82 = arith.addf %75, %77 : vector<16x16xf32>
    %83 = arith.truncf %82 : vector<16x16xf32> to vector<16x16xbf16>
    %cst_63 = arith.constant dense<0.000000e+00> : vector<16x16xf32>
    %84 = tpu.matmul %83, %23, %cst_63 {dimension_numbers = #tpu.dot_dimension_numbers<[1], [0], [0], [1], [0, 0, 1, 1], [], []>} : vector<16x16xbf16>, vector<16x16xbf16>, vector<16x16xf32> -> vector<16x16xf32>
    %85 = arith.subf %79, %81 : vector<16x16xf32>
    %86 = arith.subf %84, %79 : vector<16x16xf32>
    %87 = arith.subf %86, %81 : vector<16x16xf32>
    %c0_64 = arith.constant 0 : index
    %c0_65 = arith.constant 0 : index
    %c0_66 = arith.constant 0 : index
    %c0_67 = arith.constant 0 : index
    %88 = vector.load %arg8[%c0_64, %c0_65, %c0_66, %c0_67] : memref<2x2x16x16xf32, #tpu.memory_space<vmem>>, vector<1x1x16x16xf32>
    %89 = vector.shape_cast %88 : vector<1x1x16x16xf32> to vector<16x16xf32>
    %90 = vector.shape_cast %85 : vector<16x16xf32> to vector<1x1x16x16xf32>
    tpu.vector_store %arg8[%c0_64, %c0_65, %c0_66, %c0_67], %90 {strides = array<i32>} : memref<2x2x16x16xf32, #tpu.memory_space<vmem>>, vector<1x1x16x16xf32>,
    %c0_68 = arith.constant 0 : index
    %c1_69 = arith.constant 1 : index
    %c0_70 = arith.constant 0 : index
    %c0_71 = arith.constant 0 : index
    %91 = vector.load %arg8[%c0_68, %c1_69, %c0_70, %c0_71] : memref<2x2x16x16xf32, #tpu.memory_space<vmem>>, vector<1x1x16x16xf32>
    %92 = vector.shape_cast %91 : vector<1x1x16x16xf32> to vector<16x16xf32>
    %93 = vector.shape_cast %87 : vector<16x16xf32> to vector<1x1x16x16xf32>
    tpu.vector_store %arg8[%c0_68, %c1_69, %c0_70, %c0_71], %93 {strides = array<i32>} : memref<2x2x16x16xf32, #tpu.memory_space<vmem>>, vector<1x1x16x16xf32>,
    %94 = vector.extract_strided_slice %44 {offsets = [1, 0, 0], sizes = [1, 16, 16], strides = [1, 1, 1]} : vector<2x16x16xf32> to vector<1x16x16xf32>
    %95 = vector.shape_cast %94 : vector<1x16x16xf32> to vector<16x16xf32>
    %96 = vector.extract_strided_slice %45 {offsets = [1, 0, 0], sizes = [1, 16, 16], strides = [1, 1, 1]} : vector<2x16x16xf32> to vector<1x16x16xf32>
    %97 = vector.shape_cast %96 : vector<1x16x16xf32> to vector<16x16xf32>
    %98 = arith.truncf %95 : vector<16x16xf32> to vector<16x16xbf16>
    %cst_72 = arith.constant dense<0.000000e+00> : vector<16x16xf32>
    %99 = tpu.matmul %7, %98, %cst_72 {dimension_numbers = #tpu.dot_dimension_numbers<[1], [0], [0], [1], [0, 0, 1, 1], [], []>} : vector<16x16xbf16>, vector<16x16xbf16>, vector<16x16xf32> -> vector<16x16xf32>
    %100 = arith.truncf %97 : vector<16x16xf32> to vector<16x16xbf16>
    %cst_73 = arith.constant dense<0.000000e+00> : vector<16x16xf32>
    %101 = tpu.matmul %9, %100, %cst_73 {dimension_numbers = #tpu.dot_dimension_numbers<[1], [0], [0], [1], [0, 0, 1, 1], [], []>} : vector<16x16xbf16>, vector<16x16xbf16>, vector<16x16xf32> -> vector<16x16xf32>
    %102 = arith.addf %95, %97 : vector<16x16xf32>
    %103 = arith.truncf %102 : vector<16x16xf32> to vector<16x16xbf16>
    %cst_74 = arith.constant dense<0.000000e+00> : vector<16x16xf32>
    %104 = tpu.matmul %11, %103, %cst_74 {dimension_numbers = #tpu.dot_dimension_numbers<[1], [0], [0], [1], [0, 0, 1, 1], [], []>} : vector<16x16xbf16>, vector<16x16xbf16>, vector<16x16xf32> -> vector<16x16xf32>
    %105 = arith.subf %99, %101 : vector<16x16xf32>
    %106 = arith.subf %104, %99 : vector<16x16xf32>
    %107 = arith.subf %106, %101 : vector<16x16xf32>
    %c1_75 = arith.constant 1 : index
    %c0_76 = arith.constant 0 : index
    %c0_77 = arith.constant 0 : index
    %c0_78 = arith.constant 0 : index
    %108 = vector.load %arg2[%c1_75, %c0_76, %c0_77, %c0_78] : memref<2x2x16x16xf32, #tpu.memory_space<vmem>>, vector<1x1x16x16xf32>
    %109 = vector.shape_cast %108 : vector<1x1x16x16xf32> to vector<16x16xf32>
    %110 = arith.mulf %105, %27 : vector<16x16xf32>
    %111 = arith.addf %109, %110 : vector<16x16xf32>
    %c1_79 = arith.constant 1 : index
    %c1_80 = arith.constant 1 : index
    %c0_81 = arith.constant 0 : index
    %c0_82 = arith.constant 0 : index
    %112 = vector.load %arg2[%c1_79, %c1_80, %c0_81, %c0_82] : memref<2x2x16x16xf32, #tpu.memory_space<vmem>>, vector<1x1x16x16xf32>
    %113 = vector.shape_cast %112 : vector<1x1x16x16xf32> to vector<16x16xf32>
    %114 = arith.mulf %107, %27 : vector<16x16xf32>
    %115 = arith.addf %113, %114 : vector<16x16xf32>
    %116 = arith.truncf %111 : vector<16x16xf32> to vector<16x16xbf16>
    %cst_83 = arith.constant dense<0.000000e+00> : vector<16x16xf32>
    %117 = tpu.matmul %13, %116, %cst_83 {dimension_numbers = #tpu.dot_dimension_numbers<[1], [0], [0], [1], [0, 0, 1, 1], [], []>} : vector<16x16xbf16>, vector<16x16xbf16>, vector<16x16xf32> -> vector<16x16xf32>
    %118 = arith.truncf %115 : vector<16x16xf32> to vector<16x16xbf16>
    %cst_84 = arith.constant dense<0.000000e+00> : vector<16x16xf32>
    %119 = tpu.matmul %15, %118, %cst_84 {dimension_numbers = #tpu.dot_dimension_numbers<[1], [0], [0], [1], [0, 0, 1, 1], [], []>} : vector<16x16xbf16>, vector<16x16xbf16>, vector<16x16xf32> -> vector<16x16xf32>
    %120 = arith.addf %111, %115 : vector<16x16xf32>
    %121 = arith.truncf %120 : vector<16x16xf32> to vector<16x16xbf16>
    %cst_85 = arith.constant dense<0.000000e+00> : vector<16x16xf32>
    %122 = tpu.matmul %17, %121, %cst_85 {dimension_numbers = #tpu.dot_dimension_numbers<[1], [0], [0], [1], [0, 0, 1, 1], [], []>} : vector<16x16xbf16>, vector<16x16xbf16>, vector<16x16xf32> -> vector<16x16xf32>
    %123 = arith.subf %117, %119 : vector<16x16xf32>
    %124 = arith.subf %122, %117 : vector<16x16xf32>
    %125 = arith.subf %124, %119 : vector<16x16xf32>
    %126 = arith.truncf %123 : vector<16x16xf32> to vector<16x16xbf16>
    %cst_86 = arith.constant dense<0.000000e+00> : vector<16x16xf32>
    %127 = tpu.matmul %126, %19, %cst_86 {dimension_numbers = #tpu.dot_dimension_numbers<[1], [0], [0], [1], [0, 0, 1, 1], [], []>} : vector<16x16xbf16>, vector<16x16xbf16>, vector<16x16xf32> -> vector<16x16xf32>
    %128 = arith.truncf %125 : vector<16x16xf32> to vector<16x16xbf16>
    %cst_87 = arith.constant dense<0.000000e+00> : vector<16x16xf32>
    %129 = tpu.matmul %128, %21, %cst_87 {dimension_numbers = #tpu.dot_dimension_numbers<[1], [0], [0], [1], [0, 0, 1, 1], [], []>} : vector<16x16xbf16>, vector<16x16xbf16>, vector<16x16xf32> -> vector<16x16xf32>
    %130 = arith.addf %123, %125 : vector<16x16xf32>
    %131 = arith.truncf %130 : vector<16x16xf32> to vector<16x16xbf16>
    %cst_88 = arith.constant dense<0.000000e+00> : vector<16x16xf32>
    %132 = tpu.matmul %131, %23, %cst_88 {dimension_numbers = #tpu.dot_dimension_numbers<[1], [0], [0], [1], [0, 0, 1, 1], [], []>} : vector<16x16xbf16>, vector<16x16xbf16>, vector<16x16xf32> -> vector<16x16xf32>
    %133 = arith.subf %127, %129 : vector<16x16xf32>
    %134 = arith.subf %132, %127 : vector<16x16xf32>
    %135 = arith.subf %134, %129 : vector<16x16xf32>
    %c1_89 = arith.constant 1 : index
    %c0_90 = arith.constant 0 : index
    %c0_91 = arith.constant 0 : index
    %c0_92 = arith.constant 0 : index
    %136 = vector.load %arg8[%c1_89, %c0_90, %c0_91, %c0_92] : memref<2x2x16x16xf32, #tpu.memory_space<vmem>>, vector<1x1x16x16xf32>
    %137 = vector.shape_cast %136 : vector<1x1x16x16xf32> to vector<16x16xf32>
    %138 = vector.shape_cast %133 : vector<16x16xf32> to vector<1x1x16x16xf32>
    tpu.vector_store %arg8[%c1_89, %c0_90, %c0_91, %c0_92], %138 {strides = array<i32>} : memref<2x2x16x16xf32, #tpu.memory_space<vmem>>, vector<1x1x16x16xf32>,
    %c1_93 = arith.constant 1 : index
    %c1_94 = arith.constant 1 : index
    %c0_95 = arith.constant 0 : index
    %c0_96 = arith.constant 0 : index
    %139 = vector.load %arg8[%c1_93, %c1_94, %c0_95, %c0_96] : memref<2x2x16x16xf32, #tpu.memory_space<vmem>>, vector<1x1x16x16xf32>
    %140 = vector.shape_cast %139 : vector<1x1x16x16xf32> to vector<16x16xf32>
    %141 = vector.shape_cast %135 : vector<16x16xf32> to vector<1x1x16x16xf32>
    tpu.vector_store %arg8[%c1_93, %c1_94, %c0_95, %c0_96], %141 {strides = array<i32>} : memref<2x2x16x16xf32, #tpu.memory_space<vmem>>, vector<1x1x16x16xf32>,
    return
  }
  func.func @transform_0(%arg0: i32) -> (i32, i32, i32, i32) {
    %c0_i32 = arith.constant 0 : i32
    %c0_i32_0 = arith.constant 0 : i32
    %c0_i32_1 = arith.constant 0 : i32
    %c0_i32_2 = arith.constant 0 : i32
    return %arg0, %c0_i32, %c0_i32_0, %c0_i32_1 : i32, i32, i32, i32
  }
  func.func @transform_1(%arg0: i32) -> (i32, i32, i32, i32) {
    %c0_i32 = arith.constant 0 : i32
    %c0_i32_0 = arith.constant 0 : i32
    %c0_i32_1 = arith.constant 0 : i32
    %c0_i32_2 = arith.constant 0 : i32
    return %arg0, %c0_i32, %c0_i32_0, %c0_i32_1 : i32, i32, i32, i32
  }
  func.func @transform_2(%arg0: i32) -> (i32, i32, i32) {
    %c0_i32 = arith.constant 0 : i32
    %c0_i32_0 = arith.constant 0 : i32
    %c0_i32_1 = arith.constant 0 : i32
    %c0_i32_2 = arith.constant 0 : i32
    return %c0_i32, %c0_i32_0, %c0_i32_1 : i32, i32, i32
  }
  func.func @transform_3(%arg0: i32) -> (i32, i32, i32) {
    %c0_i32 = arith.constant 0 : i32
    %c0_i32_0 = arith.constant 0 : i32
    %c0_i32_1 = arith.constant 0 : i32
    %c0_i32_2 = arith.constant 0 : i32
    return %c0_i32, %c0_i32_0, %c0_i32_1 : i32, i32, i32
  }
  func.func @transform_4(%arg0: i32) -> (i32, i32, i32) {
    %c0_i32 = arith.constant 0 : i32
    %c0_i32_0 = arith.constant 0 : i32
    %c0_i32_1 = arith.constant 0 : i32
    %c0_i32_2 = arith.constant 0 : i32
    return %c0_i32, %c0_i32_0, %c0_i32_1 : i32, i32, i32
  }
  func.func @transform_5(%arg0: i32) -> (i32, i32, i32) {
    %c0_i32 = arith.constant 0 : i32
    %c0_i32_0 = arith.constant 0 : i32
    %c0_i32_1 = arith.constant 0 : i32
    %c0_i32_2 = arith.constant 0 : i32
    return %c0_i32, %c0_i32_0, %c0_i32_1 : i32, i32, i32
  }
  func.func @transform_6(%arg0: i32) -> (i32, i32, i32) {
    %c0_i32 = arith.constant 0 : i32
    %c0_i32_0 = arith.constant 0 : i32
    %c0_i32_1 = arith.constant 0 : i32
    %c0_i32_2 = arith.constant 0 : i32
    return %c0_i32, %c0_i32_0, %c0_i32_1 : i32, i32, i32
  }
  func.func @transform_7(%arg0: i32) -> (i32, i32, i32, i32) {
    %c0_i32 = arith.constant 0 : i32
    %c0_i32_0 = arith.constant 0 : i32
    %c0_i32_1 = arith.constant 0 : i32
    %c0_i32_2 = arith.constant 0 : i32
    return %arg0, %c0_i32, %c0_i32_0, %c0_i32_1 : i32, i32, i32, i32
  }
}

</mosaic_0001>

<llo_original>
// kernel: custom-call.1
$region0: #{custom-call.1}
  %s0 = inlined_call_operand.hbm [shape: c64[2,2,16,16], index: 0, kind: input, shape index: {}]
  %s1 = inlined_call_operand.vmem [shape: f32[2,2,16,16], index: 1, kind: output, shape index: {}]
  %s2 = scalar_lea.hbm %s0, 1024
  $region1: #{custom-call.1} parent=0
    #allocation0 [shape = 's32[1]{0}', space=sflag, size = 0x4, scoped, tag = 'scoped memory for custom-call.1']
    %3 = vsyncpa [#allocation0], 0
    %s4 = sshll.u32 %s1, 4
    %s5 = int_to_ptr.vmem [resolvable:$true] %s4
    %7 = dma.hbm_to_vmem [thread:$0]  %s2, 1024, %s5, [#allocation0]
    %8 = dma.done [#allocation0], 1024
    %9 = vsyncpa [#allocation0], 1

// kernel: custom-call
$region0: #{custom-call}
  %s0 = inlined_call_operand.hbm [shape: c64[2,2,16,16], index: 0, kind: input, shape index: {}]
  %s1 = inlined_call_operand.vmem [shape: f32[2,2,16,16], index: 1, kind: output, shape index: {}]
  $region1: #{custom-call} parent=0
    #allocation0 [shape = 's32[1]{0}', space=sflag, size = 0x4, scoped, tag = 'scoped memory for custom-call']
    %2 = vsyncpa [#allocation0], 0
    %s3 = sshll.u32 %s1, 4
    %s4 = int_to_ptr.vmem [resolvable:$true] %s3
    %6 = dma.hbm_to_vmem [thread:$0]  %s0, 1024, %s4, [#allocation0]
    %7 = dma.done [#allocation0], 1024
    %8 = vsyncpa [#allocation0], 1

// kernel: data_consistency_layer.1
$region0: #{data_consistency_layer.1}
  #allocation0 [shape = 'u32[]', space=smem, size = 0x4, offset = 0x4, fixed_abs, tag = 'smem constant byte address 0x4 - core index']
  #allocation1 [shape = 'u32[144,128]{1,0:T(1,128)}', space=vmem, size = 0x12000, scoped, tag = 'internal scratch']
  %s0 = inlined_call_operand.vmem [shape: f32[4,2,16,16], index: 0, kind: input, shape index: {}]
  %s1 = inlined_call_operand.vmem [shape: f32[4,2,16,16], index: 1, kind: input, shape index: {}]
  %s2 = inlined_call_operand.vmem [shape: f32[1,16,16], index: 2, kind: input, shape index: {}]
  %s3 = inlined_call_operand.vmem [shape: bf16[3,16,16], index: 3, kind: input, shape index: {}]
  %s4 = inlined_call_operand.vmem [shape: bf16[3,16,16], index: 4, kind: input, shape index: {}]
  %s5 = inlined_call_operand.vmem [shape: bf16[3,16,16], index: 5, kind: input, shape index: {}]
  %s6 = inlined_call_operand.vmem [shape: bf16[3,16,16], index: 6, kind: input, shape index: {}]
  %s7 = inlined_call_operand.hbm [shape: f32[4,2,16,16], index: 7, kind: output, shape index: {}]
  %s8 = sld [smem:[#allocation0]]
  $region61: #{data_consistency_layer.1} parent=0
    _
  %s10 = ssub.s32 1, %s8
  %s11 = scalar_select 0, %s10, %s8
  $region1: #{data_consistency_layer.1} parent=0
    #allocation2 [shape = 'u8[65536]{0}', space=vmem, size = 0x10000, scoped, tag = 'output window, operand 0']
    #allocation3 [shape = 's32[2]{0}', space=sflag, size = 0x8, scoped, tag = 'scoped memory for data_consistency_layer.1']
    %12 = vsyncpa [#allocation3], 0
    %s13 = scalar_lea.sflag [#allocation3], 1
    %14 = vsyncpa %s13, 0
    loop: start=0, step=1, limit=4
    $region2: #{data_consistency_layer.1} parent=1 // loop_pre_header
      _
    $region3: #{data_consistency_layer.1} parent=1 // loop_header
      %s16 = sphi 0, %s20
      %p17 = scmp.ge.s32.totalorder %s16, 4
      %s26 = sphi 0, %s28
      %s29 = sphi 0, %s26
      %s30 = sphi 0, %s29
      %s46 = sphi 0, %s30
      %s52 = sphi 0, %s54
      %s55 = sphi 0, %s52
      %s56 = sphi 0, %s55
      %s72 = sphi 0, %s56
      %s76 = sphi 0, %s76
      %s78 = sphi 0, %s76
      %s79 = sphi 0, %s78
      %s93 = sphi 0, %s79
      %s97 = sphi 0, %s97
      %s99 = sphi 0, %s97
      %s100 = sphi 0, %s99
      %s114 = sphi 0, %s100
      %s118 = sphi 0, %s118
      %s120 = sphi 0, %s118
      %s121 = sphi 0, %s120
      %s135 = sphi 0, %s121
      %s139 = sphi 0, %s139
      %s141 = sphi 0, %s139
      %s142 = sphi 0, %s141
      %s156 = sphi 0, %s142
      %s160 = sphi 0, %s160
      %s162 = sphi 0, %s160
      %s163 = sphi 0, %s162
      %s177 = sphi 0, %s163
      %s183 = sphi 0, %s185
      %s186 = sphi 0, %s183
      %s187 = sphi 0, %s186
      %s203 = sphi 0, %s187
    $region4: #{data_consistency_layer.1} parent=1 // loop_header_branch
      %19 = sbr.rel (%p17) target = $region8
    $region5: #{data_consistency_layer.1} parent=1 // loop_body
      %s21 = ssub.s32 %s16, 1
      %s22 = ssub.s32 %s16, 2
      %s23 = sadd.s32 %s16, 1
      %s24 = ssub.s32 %s16, %s23
      %p25 = scmp.eq.s32.totalorder %s24, 0
      %s27 = sadd.s32 %s26, 1
      %s28 = scalar_select %p25, %s26, %s27
      %p31 = pneg %p25
      %p32 = scmp.eq.s32.totalorder %s16, 1
      %p33 = por %p31, %p32
      %p34 = scmp.ne.s32.totalorder %s26, %s29
      %p35 = scmp.eq.s32.totalorder %s16, 0
      %p36 = por %p34, %p35
      %p37 = scmp.ne.s32.totalorder %s26, %s29
      %p38 = scmp.eq.s32.totalorder %s21, 1
      %p39 = por %p37, %p38
      %p40 = scmp.ne.s32.totalorder %s29, %s30
      %p41 = scmp.eq.s32.totalorder %s21, 0
      %p42 = por %p40, %p41
      %p43 = scmp.ne.s32.totalorder %s29, %s30
      %p44 = scmp.eq.s32.totalorder %s22, 1
      %p45 = por %p43, %p44
      %p47 = scmp.ne.s32.totalorder %s30, %s46
      %p48 = scmp.eq.s32.totalorder %s22, 0
      %p49 = por %p47, %p48
      %s50 = ssub.s32 %s16, %s23
      %p51 = scmp.eq.s32.totalorder %s50, 0
      %s53 = sadd.s32 %s52, 1
      %s54 = scalar_select %p51, %s52, %s53
      %p57 = pneg %p51
      %p58 = scmp.eq.s32.totalorder %s16, 1
      %p59 = por %p57, %p58
      %p60 = scmp.ne.s32.totalorder %s52, %s55
      %p61 = scmp.eq.s32.totalorder %s16, 0
      %p62 = por %p60, %p61
      %p63 = scmp.ne.s32.totalorder %s52, %s55
      %p64 = scmp.eq.s32.totalorder %s21, 1
      %p65 = por %p63, %p64
      %p66 = scmp.ne.s32.totalorder %s55, %s56
      %p67 = scmp.eq.s32.totalorder %s21, 0
      %p68 = por %p66, %p67
      %p69 = scmp.ne.s32.totalorder %s55, %s56
      %p70 = scmp.eq.s32.totalorder %s22, 1
      %p71 = por %p69, %p70
      %p73 = scmp.ne.s32.totalorder %s56, %s72
      %p74 = scmp.eq.s32.totalorder %s22, 0
      %p75 = por %p73, %p74
      %s77 = sadd.s32 %s76, 1
      %p80 = scmp.eq.s32.totalorder %s16, 1
      %p81 = scmp.ne.s32.totalorder %s76, %s78
      %p82 = scmp.eq.s32.totalorder %s16, 0
      %p83 = por %p81, %p82
      %p84 = scmp.ne.s32.totalorder %s76, %s78
      %p85 = scmp.eq.s32.totalorder %s21, 1
      %p86 = por %p84, %p85
      %p87 = scmp.ne.s32.totalorder %s78, %s79
      %p88 = scmp.eq.s32.totalorder %s21, 0
      %p89 = por %p87, %p88
      %p90 = scmp.ne.s32.totalorder %s78, %s79
      %p91 = scmp.eq.s32.totalorder %s22, 1
      %p92 = por %p90, %p91
      %p94 = scmp.ne.s32.totalorder %s79, %s93
      %p95 = scmp.eq.s32.totalorder %s22, 0
      %p96 = por %p94, %p95
      %s98 = sadd.s32 %s97, 1
      %p101 = scmp.eq.s32.totalorder %s16, 1
      %p102 = scmp.ne.s32.totalorder %s97, %s99
      %p103 = scmp.eq.s32.totalorder %s16, 0
      %p104 = por %p102, %p103
      %p105 = scmp.ne.s32.totalorder %s97, %s99
      %p106 = scmp.eq.s32.totalorder %s21, 1
      %p107 = por %p105, %p106
      %p108 = scmp.ne.s32.totalorder %s99, %s100
      %p109 = scmp.eq.s32.totalorder %s21, 0
      %p110 = por %p108, %p109
      %p111 = scmp.ne.s32.totalorder %s99, %s100
      %p112 = scmp.eq.s32.totalorder %s22, 1
      %p113 = por %p111, %p112
      %p115 = scmp.ne.s32.totalorder %s100, %s114
      %p116 = scmp.eq.s32.totalorder %s22, 0
      %p117 = por %p115, %p116
      %s119 = sadd.s32 %s118, 1
      %p122 = scmp.eq.s32.totalorder %s16, 1
      %p123 = scmp.ne.s32.totalorder %s118, %s120
      %p124 = scmp.eq.s32.totalorder %s16, 0
      %p125 = por %p123, %p124
      %p126 = scmp.ne.s32.totalorder %s118, %s120
      %p127 = scmp.eq.s32.totalorder %s21, 1
      %p128 = por %p126, %p127
      %p129 = scmp.ne.s32.totalorder %s120, %s121
      %p130 = scmp.eq.s32.totalorder %s21, 0
      %p131 = por %p129, %p130
      %p132 = scmp.ne.s32.totalorder %s120, %s121
      %p133 = scmp.eq.s32.totalorder %s22, 1
      %p134 = por %p132, %p133
      %p136 = scmp.ne.s32.totalorder %s121, %s135
      %p137 = scmp.eq.s32.totalorder %s22, 0
      %p138 = por %p136, %p137
      %s140 = sadd.s32 %s139, 1
      %p143 = scmp.eq.s32.totalorder %s16, 1
      %p144 = scmp.ne.s32.totalorder %s139, %s141
      %p145 = scmp.eq.s32.totalorder %s16, 0
      %p146 = por %p144, %p145
      %p147 = scmp.ne.s32.totalorder %s139, %s141
      %p148 = scmp.eq.s32.totalorder %s21, 1
      %p149 = por %p147, %p148
      %p150 = scmp.ne.s32.totalorder %s141, %s142
      %p151 = scmp.eq.s32.totalorder %s21, 0
      %p152 = por %p150, %p151
      %p153 = scmp.ne.s32.totalorder %s141, %s142
      %p154 = scmp.eq.s32.totalorder %s22, 1
      %p155 = por %p153, %p154
      %p157 = scmp.ne.s32.totalorder %s142, %s156
      %p158 = scmp.eq.s32.totalorder %s22, 0
      %p159 = por %p157, %p158
      %s161 = sadd.s32 %s160, 1
      %p164 = scmp.eq.s32.totalorder %s16, 1
      %p165 = scmp.ne.s32.totalorder %s160, %s162
      %p166 = scmp.eq.s32.totalorder %s16, 0
      %p167 = por %p165, %p166
      %p168 = scmp.ne.s32.totalorder %s160, %s162
      %p169 = scmp.eq.s32.totalorder %s21, 1
      %p170 = por %p168, %p169
      %p171 = scmp.ne.s32.totalorder %s162, %s163
      %p172 = scmp.eq.s32.totalorder %s21, 0
      %p173 = por %p171, %p172
      %p174 = scmp.ne.s32.totalorder %s162, %s163
      %p175 = scmp.eq.s32.totalorder %s22, 1
      %p176 = por %p174, %p175
      %p178 = scmp.ne.s32.totalorder %s163, %s177
      %p179 = scmp.eq.s32.totalorder %s22, 0
      %p180 = por %p178, %p179
      %s181 = ssub.s32 %s16, %s23
      %p182 = scmp.eq.s32.totalorder %s181, 0
      %s184 = sadd.s32 %s183, 1
      %s185 = scalar_select %p182, %s183, %s184
      %p188 = pneg %p182
      %p189 = scmp.eq.s32.totalorder %s16, 1
      %p190 = por %p188, %p189
      %p191 = scmp.ne.s32.totalorder %s183, %s186
      %p192 = scmp.eq.s32.totalorder %s16, 0
      %p193 = por %p191, %p192
      %p194 = scmp.ne.s32.totalorder %s183, %s186
      %p195 = scmp.eq.s32.totalorder %s21, 1
      %p196 = por %p194, %p195
      %p197 = scmp.ne.s32.totalorder %s186, %s187
      %p198 = scmp.eq.s32.totalorder %s21, 0
      %p199 = por %p197, %p198
      %p200 = scmp.ne.s32.totalorder %s186, %s187
      %p201 = scmp.eq.s32.totalorder %s22, 1
      %p202 = por %p200, %p201
      %p204 = scmp.ne.s32.totalorder %s187, %s203
      %p205 = scmp.eq.s32.totalorder %s22, 0
      %p206 = por %p204, %p205
      %p207 = scmp.le.s32.totalorder 1, %s16
      %p208 = scmp.lt.s32.totalorder %s16, 3
      %p209 = pnand %p207, %p208
      %p210 = pneg %p209
      // Predicated region
      $region9: #{data_consistency_layer.1} parent=5 // pred_check
        _
      $region10: #{data_consistency_layer.1} parent=5 // pred_check_branch
        %212 = sbr.rel (%p209) target = $region12
      $region11: #{data_consistency_layer.1} parent=5 // pred_region
        %s213 = ssub.s32 %s16, 1
        // Predicated region
        $region13: #{data_consistency_layer.1} parent=11 // pred_check
          %p214 = pneg %p89
        $region14: #{data_consistency_layer.1} parent=11 // pred_check_branch
          %216 = sbr.rel (%p214) target = $region16
        $region15: #{data_consistency_layer.1} parent=11 // pred_region
          _
        $region16: #{data_consistency_layer.1} parent=11 // pred_fallthru
          _
        // Predicated region
        $region17: #{data_consistency_layer.1} parent=11 // pred_check
          %p217 = pneg %p110
        $region18: #{data_consistency_layer.1} parent=11 // pred_check_branch
          %219 = sbr.rel (%p217) target = $region20
        $region19: #{data_consistency_layer.1} parent=11 // pred_region
          _
        $region20: #{data_consistency_layer.1} parent=11 // pred_fallthru
          _
        // Predicated region
        $region21: #{data_consistency_layer.1} parent=11 // pred_check
          %p220 = pneg %p131
        $region22: #{data_consistency_layer.1} parent=11 // pred_check_branch
          %222 = sbr.rel (%p220) target = $region24
        $region23: #{data_consistency_layer.1} parent=11 // pred_region
          _
        $region24: #{data_consistency_layer.1} parent=11 // pred_fallthru
          _
        // Predicated region
        $region25: #{data_consistency_layer.1} parent=11 // pred_check
          %p223 = pneg %p152
        $region26: #{data_consistency_layer.1} parent=11 // pred_check_branch
          %225 = sbr.rel (%p223) target = $region28
        $region27: #{data_consistency_layer.1} parent=11 // pred_region
          _
        $region28: #{data_consistency_layer.1} parent=11 // pred_fallthru
          _
        // Predicated region
        $region29: #{data_consistency_layer.1} parent=11 // pred_check
          %p226 = pneg %p173
        $region30: #{data_consistency_layer.1} parent=11 // pred_check_branch
          %228 = sbr.rel (%p226) target = $region32
        $region31: #{data_consistency_layer.1} parent=11 // pred_region
          _
        $region32: #{data_consistency_layer.1} parent=11 // pred_fallthru
          _
      $region12: #{data_consistency_layer.1} parent=5 // pred_fallthru
        _
      %p229 = scmp.lt.s32.totalorder %s16, 2
      // Predicated region
      $region33: #{data_consistency_layer.1} parent=5 // pred_check
        %p230 = pneg %p229
      $region34: #{data_consistency_layer.1} parent=5 // pred_check_branch
        %232 = sbr.rel (%p230) target = $region36
      $region35: #{data_consistency_layer.1} parent=5 // pred_region
        // Predicated region
        $region37: #{data_consistency_layer.1} parent=35 // pred_check
          %p233 = pneg %p36
        $region38: #{data_consistency_layer.1} parent=35 // pred_check_branch
          %235 = sbr.rel (%p233) target = $region40
        $region39: #{data_consistency_layer.1} parent=35 // pred_region
          %s236 = smul.u32 2, %s16
          %p237 = scmp.lt.s32.totalorder %s236, 3
          %s238 = scalar_select %p237, %s236, 3
          %s239 = smul.addr %s238, 4
          %s240 = smul.addr %s239, 8
          %s241 = scalar_lea.vmem %s0, %s240
          %s242 = smul.u32 2, %s16
        $region40: #{data_consistency_layer.1} parent=35 // pred_fallthru
          _
        // Predicated region
        $region41: #{data_consistency_layer.1} parent=35 // pred_check
          %p243 = pneg %p62
        $region42: #{data_consistency_layer.1} parent=35 // pred_check_branch
          %245 = sbr.rel (%p243) target = $region44
        $region43: #{data_consistency_layer.1} parent=35 // pred_region
          %s246 = smul.u32 2, %s16
          %p247 = scmp.lt.s32.totalorder %s246, 3
          %s248 = scalar_select %p247, %s246, 3
          %s249 = smul.addr %s248, 4
          %s250 = smul.addr %s249, 8
          %s251 = scalar_lea.vmem %s1, %s250
          %s252 = smul.u32 2, %s16
        $region44: #{data_consistency_layer.1} parent=35 // pred_fallthru
          _
      $region36: #{data_consistency_layer.1} parent=5 // pred_fallthru
        _
      %p253 = scmp.le.s32.totalorder 1, %s16
      %p254 = scmp.lt.s32.totalorder %s16, 3
      %p255 = pnand %p253, %p254
      %p256 = pneg %p255
      // Predicated region
      $region45: #{data_consistency_layer.1} parent=5 // pred_check
        _
      $region46: #{data_consistency_layer.1} parent=5 // pred_check_branch
        %258 = sbr.rel (%p255) target = $region48
      $region47: #{data_consistency_layer.1} parent=5 // pred_region
        %s259 = ssub.s32 %s16, 1
        %s260 = smul.u32 2, %s21
        %p261 = scmp.lt.s32.totalorder %s260, 3
        %s262 = scalar_select %p261, %s260, 3
        %s263 = smul.addr %s262, 4
        %s264 = smul.addr %s263, 8
        %s265 = scalar_lea.vmem %s0, %s264
        %p266 = pneg %p42
        %p267 = pneg %p39
        %s268 = smul.u32 2, %s21
        %p269 = scmp.lt.s32.totalorder %s268, 3
        %s270 = scalar_select %p269, %s268, 3
        %s271 = smul.addr %s270, 4
        %s272 = smul.addr %s271, 8
        %s273 = scalar_lea.vmem %s1, %s272
        %p274 = pneg %p68
        %p275 = pneg %p65
        %p276 = pneg %p89
        %p277 = pneg %p86
        %p278 = pneg %p110
        %p279 = pneg %p107
        %p280 = pneg %p131
        %p281 = pneg %p128
        %p282 = pneg %p152
        %p283 = pneg %p149
        %p284 = pneg %p173
        %p285 = pneg %p170
        %p286 = pneg %p199
        %p287 = pneg %p196
        %s288 = sand.u32 %s186, 1
        %s289 = scalar_lea.sflag [#allocation3], %s288
        %s290 = sand.u32 %s186, 1
        %s291 = smul.addr %s290, 64
        %s292 = scalar_lea.vmem [#allocation2], %s291
        %s293 = smul.u32 2, %s21
        %p294 = scmp.lt.s32.totalorder %s293, 3
        %s295 = scalar_select %p294, %s293, 3
        %s296 = smul.addr %s295, 4
        %s297 = smul.addr %s296, 8
        %s298 = scalar_lea.vmem %s0, %s297
        %s299 = smul.u32 2, %s21
        %s300 = smul.u32 2, %s21
        %p301 = scmp.lt.s32.totalorder %s300, 3
        %s302 = scalar_select %p301, %s300, 3
        %s303 = smul.addr %s302, 4
        %s304 = smul.addr %s303, 8
        %s305 = scalar_lea.vmem %s1, %s304
        %s306 = smul.u32 2, %s21
        %s307 = smul.u32 2, %s21
        %v309 = vld [vmem:[%s3] sm:$0xf]
        %v310 = vld [vmem:[%s3 + $0x4] sm:$0xf]
        %s311 = scalar_lea.vmem %s3, 8
        %v312 = vld [vmem:[%s311] sm:$0xf]
        %v313 = vld [vmem:[%s311 + $0x4] sm:$0xf]
        %s314 = scalar_lea.vmem %s3, 16
        %v315 = vld [vmem:[%s314] sm:$0xf]
        %v316 = vld [vmem:[%s314 + $0x4] sm:$0xf]
        %v317 = vld [vmem:[%s4] sm:$0xf]
        %v318 = vld [vmem:[%s4 + $0x4] sm:$0xf]
        %s319 = scalar_lea.vmem %s4, 8
        %v320 = vld [vmem:[%s319] sm:$0xf]
        %v321 = vld [vmem:[%s319 + $0x4] sm:$0xf]
        %s322 = scalar_lea.vmem %s4, 16
        %v323 = vld [vmem:[%s322] sm:$0xf]
        %v324 = vld [vmem:[%s322 + $0x4] sm:$0xf]
        %v325 = vld [vmem:[%s5] sm:$0xf]
        %v326 = vld [vmem:[%s5 + $0x4] sm:$0xf]
        %s327 = scalar_lea.vmem %s5, 8
        %v328 = vld [vmem:[%s327] sm:$0xf]
        %v329 = vld [vmem:[%s327 + $0x4] sm:$0xf]
        %s330 = scalar_lea.vmem %s5, 16
        %v331 = vld [vmem:[%s330] sm:$0xf]
        %v332 = vld [vmem:[%s330 + $0x4] sm:$0xf]
        %v333 = vld [vmem:[%s6] sm:$0xf]
        %v334 = vld [vmem:[%s6 + $0x4] sm:$0xf]
        %s335 = scalar_lea.vmem %s6, 8
        %v336 = vld [vmem:[%s335] sm:$0xf]
        %v337 = vld [vmem:[%s335 + $0x4] sm:$0xf]
        %s338 = scalar_lea.vmem %s6, 16
        %v339 = vld [vmem:[%s338] sm:$0xf]
        %v340 = vld [vmem:[%s338 + $0x4] sm:$0xf]
        %v341 = vld [vmem:[%s2] sm:$0xff]
        %v342 = vld [vmem:[%s2 + $0x8] sm:$0xff]
        %v343 = vsub.f32 1.0, %v341
        %v344 = vsub.f32 1.0, %v342
        %v345 = vld [vmem:[%s298] sm:$0xff]
        %v346 = vld [vmem:[%s298 + $0x8] sm:$0xff]
        %v347 = vld [vmem:[%s298 + $0x20] sm:$0xff]
        %v348 = vld [vmem:[%s298 + $0x28] sm:$0xff]
        %s349 = scalar_lea.vmem %s298, 16
        %v350 = vld [vmem:[%s349] sm:$0xff]
        %v351 = vld [vmem:[%s349 + $0x8] sm:$0xff]
        %v352 = vld [vmem:[%s349 + $0x20] sm:$0xff]
        %v353 = vld [vmem:[%s349 + $0x28] sm:$0xff]
        %v354 = vpack.c.bf16 %v346, %v345
        %v355 = vpack.c.bf16 %v348, %v347
        %v358 = vunpack.c.l.b16 %v309
        %v359 = vunpack.c.l.b16 %v310
        %v360 = vpack.c.b16 %v359, %v358
        %vm362 = vcmask 130048
        %v364 = vsel %vm362, %v354, 0
        %v367 = vsel %vm362, %v355, 0
        %369 = vmatprep.subr.bf16.mxu0 0
        %370 = vmatpush1.bf16.msra.mxu0 %v360
        %371 = vmatprep.subr.bf16.mxu0 0
        %372 = vmatpush1.bf16.msra.mxu0 0
        %373 = vmatprep.subr.bf16.mxu0 0
        %374 = vmatpush1.bf16.msra.mxu0 0
        %375 = vmatprep.subr.bf16.mxu0 0
        %376 = vmatpush1.bf16.msra.mxu0 0
        %377 = vmatprep.subr.bf16.mxu0 0
        %378 = vmatpush1.bf16.msra.mxu0 0
        %379 = vmatprep.subr.bf16.mxu0 0
        %380 = vmatpush1.bf16.msra.mxu0 0
        %381 = vmatprep.subr.bf16.mxu0 0
        %382 = vmatpush1.bf16.msra.mxu0 0
        %383 = vmatprep.subr.bf16.mxu0 0
        %384 = vmatpush1.bf16.msra.mxu0 0
        %385 = vmatprep.subr.bf16.mxu0 0
        %386 = vmatpush1.bf16.msra.mxu0 0
        %387 = vmatprep.subr.bf16.mxu0 0
        %388 = vmatpush1.bf16.msra.mxu0 0
        %389 = vmatprep.subr.bf16.mxu0 0
        %390 = vmatpush1.bf16.msra.mxu0 0
        %391 = vmatprep.subr.bf16.mxu0 0
        %392 = vmatpush1.bf16.msra.mxu0 0
        %393 = vmatprep.subr.bf16.mxu0 0
        %394 = vmatpush1.bf16.msra.mxu0 0
        %395 = vmatprep.subr.bf16.mxu0 0
        %396 = vmatpush1.bf16.msra.mxu0 0
        %397 = vmatprep.subr.bf16.mxu0 0
        %398 = vmatpush1.bf16.msra.mxu0 0
        %399 = vmatprep.subr.bf16.mxu0 0
        %400 = vmatpush1.bf16.msra.mxu0 0
        %401 = vmatprep.mubr.bf16.mxu0 0
        %402 = vmatmul.mubr.bf16.gmra.mrb[0].mxu0 %v364
        %v403 = vpop.f32.mrb[0].mxu0
        %v404 = vadd.f32 0.0, %v403
        %v405 = vpop.f32.mrb[0].mxu0
        %v406 = vpop.f32.mrb[0].mxu0
        %v407 = vadd.f32 0.0, %v406
        %v408 = vpop.f32.mrb[0].mxu0
        %409 = vmatprep.mubr.bf16.mxu0 0
        %410 = vmatmul.mubr.bf16.gmra.mrb[0].mxu0 %v367
        %v411 = vpop.f32.mrb[0].mxu0
        %v412 = vadd.f32 0.0, %v411
        %v413 = vpop.f32.mrb[0].mxu0
        %v414 = vpop.f32.mrb[0].mxu0
        %v415 = vadd.f32 0.0, %v414
        %v416 = vpop.f32.mrb[0].mxu0
        %417 = vdwg.mxu0
        %v418 = vpack.c.bf16 %v351, %v350
        %v419 = vpack.c.bf16 %v353, %v352
        %v422 = vunpack.c.l.b16 %v312
        %v423 = vunpack.c.l.b16 %v313
        %v424 = vpack.c.b16 %v423, %v422
        %v427 = vsel %vm362, %v418, 0
        %v430 = vsel %vm362, %v419, 0
        %432 = vmatprep.subr.bf16.mxu0 0
        %433 = vmatpush1.bf16.msra.mxu0 %v424
        %434 = vmatprep.subr.bf16.mxu0 0
        %435 = vmatpush1.bf16.msra.mxu0 0
        %436 = vmatprep.subr.bf16.mxu0 0
        %437 = vmatpush1.bf16.msra.mxu0 0
        %438 = vmatprep.subr.bf16.mxu0 0
        %439 = vmatpush1.bf16.msra.mxu0 0
        %440 = vmatprep.subr.bf16.mxu0 0
        %441 = vmatpush1.bf16.msra.mxu0 0
        %442 = vmatprep.subr.bf16.mxu0 0
        %443 = vmatpush1.bf16.msra.mxu0 0
        %444 = vmatprep.subr.bf16.mxu0 0
        %445 = vmatpush1.bf16.msra.mxu0 0
        %446 = vmatprep.subr.bf16.mxu0 0
        %447 = vmatpush1.bf16.msra.mxu0 0
        %448 = vmatprep.subr.bf16.mxu0 0
        %449 = vmatpush1.bf16.msra.mxu0 0
        %450 = vmatprep.subr.bf16.mxu0 0
        %451 = vmatpush1.bf16.msra.mxu0 0
        %452 = vmatprep.subr.bf16.mxu0 0
        %453 = vmatpush1.bf16.msra.mxu0 0
        %454 = vmatprep.subr.bf16.mxu0 0
        %455 = vmatpush1.bf16.msra.mxu0 0
        %456 = vmatprep.subr.bf16.mxu0 0
        %457 = vmatpush1.bf16.msra.mxu0 0
        %458 = vmatprep.subr.bf16.mxu0 0
        %459 = vmatpush1.bf16.msra.mxu0 0
        %460 = vmatprep.subr.bf16.mxu0 0
        %461 = vmatpush1.bf16.msra.mxu0 0
        %462 = vmatprep.subr.bf16.mxu0 0
        %463 = vmatpush1.bf16.msra.mxu0 0
        %464 = vmatprep.mubr.bf16.mxu0 0
        %465 = vmatmul.mubr.bf16.gmra.mrb[0].mxu0 %v427
        %v466 = vpop.f32.mrb[0].mxu0
        %v467 = vadd.f32 0.0, %v466
        %v468 = vpop.f32.mrb[0].mxu0
        %v469 = vpop.f32.mrb[0].mxu0
        %v470 = vadd.f32 0.0, %v469
        %v471 = vpop.f32.mrb[0].mxu0
        %472 = vmatprep.mubr.bf16.mxu0 0
        %473 = vmatmul.mubr.bf16.gmra.mrb[0].mxu0 %v430
        %v474 = vpop.f32.mrb[0].mxu0
        %v475 = vadd.f32 0.0, %v474
        %v476 = vpop.f32.mrb[0].mxu0
        %v477 = vpop.f32.mrb[0].mxu0
        %v478 = vadd.f32 0.0, %v477
        %v479 = vpop.f32.mrb[0].mxu0
        %480 = vdwg.mxu0
        %v481 = vadd.f32 %v345, %v350
        %v482 = vadd.f32 %v346, %v351
        %v483 = vadd.f32 %v347, %v352
        %v484 = vadd.f32 %v348, %v353
        %v485 = vpack.c.bf16 %v482, %v481
        %v486 = vpack.c.bf16 %v484, %v483
        %v489 = vunpack.c.l.b16 %v315
        %v490 = vunpack.c.l.b16 %v316
        %v491 = vpack.c.b16 %v490, %v489
        %v494 = vsel %vm362, %v485, 0
        %v497 = vsel %vm362, %v486, 0
        %499 = vmatprep.subr.bf16.mxu0 0
        %500 = vmatpush1.bf16.msra.mxu0 %v491
        %501 = vmatprep.subr.bf16.mxu0 0
        %502 = vmatpush1.bf16.msra.mxu0 0
        %503 = vmatprep.subr.bf16.mxu0 0
        %504 = vmatpush1.bf16.msra.mxu0 0
        %505 = vmatprep.subr.bf16.mxu0 0
        %506 = vmatpush1.bf16.msra.mxu0 0
        %507 = vmatprep.subr.bf16.mxu0 0
        %508 = vmatpush1.bf16.msra.mxu0 0
        %509 = vmatprep.subr.bf16.mxu0 0
        %510 = vmatpush1.bf16.msra.mxu0 0
        %511 = vmatprep.subr.bf16.mxu0 0
        %512 = vmatpush1.bf16.msra.mxu0 0
        %513 = vmatprep.subr.bf16.mxu0 0
        %514 = vmatpush1.bf16.msra.mxu0 0
        %515 = vmatprep.subr.bf16.mxu0 0
        %516 = vmatpush1.bf16.msra.mxu0 0
        %517 = vmatprep.subr.bf16.mxu0 0
        %518 = vmatpush1.bf16.msra.mxu0 0
        %519 = vmatprep.subr.bf16.mxu0 0
        %520 = vmatpush1.bf16.msra.mxu0 0
        %521 = vmatprep.subr.bf16.mxu0 0
        %522 = vmatpush1.bf16.msra.mxu0 0
        %523 = vmatprep.subr.bf16.mxu0 0
        %524 = vmatpush1.bf16.msra.mxu0 0
        %525 = vmatprep.subr.bf16.mxu0 0
        %526 = vmatpush1.bf16.msra.mxu0 0
        %527 = vmatprep.subr.bf16.mxu0 0
        %528 = vmatpush1.bf16.msra.mxu0 0
        %529 = vmatprep.subr.bf16.mxu0 0
        %530 = vmatpush1.bf16.msra.mxu0 0
        %531 = vmatprep.mubr.bf16.mxu0 0
        %532 = vmatmul.mubr.bf16.gmra.mrb[0].mxu0 %v494
        %v533 = vpop.f32.mrb[0].mxu0
        %v534 = vadd.f32 0.0, %v533
        %v535 = vpop.f32.mrb[0].mxu0
        %v536 = vpop.f32.mrb[0].mxu0
        %v537 = vadd.f32 0.0, %v536
        %v538 = vpop.f32.mrb[0].mxu0
        %539 = vmatprep.mubr.bf16.mxu0 0
        %540 = vmatmul.mubr.bf16.gmra.mrb[0].mxu0 %v497
        %v541 = vpop.f32.mrb[0].mxu0
        %v542 = vadd.f32 0.0, %v541
        %v543 = vpop.f32.mrb[0].mxu0
        %v544 = vpop.f32.mrb[0].mxu0
        %v545 = vadd.f32 0.0, %v544
        %v546 = vpop.f32.mrb[0].mxu0
        %547 = vdwg.mxu0
        %v548 = vsub.f32 %v404, %v467
        %v549 = vsub.f32 %v407, %v470
        %v550 = vsub.f32 %v412, %v475
        %v551 = vsub.f32 %v415, %v478
        %v552 = vsub.f32 %v534, %v404
        %v553 = vsub.f32 %v537, %v407
        %v554 = vsub.f32 %v542, %v412
        %v555 = vsub.f32 %v545, %v415
        %v556 = vsub.f32 %v552, %v467
        %v557 = vsub.f32 %v553, %v470
        %v558 = vsub.f32 %v554, %v475
        %v559 = vsub.f32 %v555, %v478
        %v560 = vpack.c.bf16 %v549, %v548
        %v563 = vunpack.c.l.b16 %v317
        %v564 = vunpack.c.l.b16 %v318
        %v565 = vpack.c.b16 %v564, %v563
        %v567 = vsel %vm362, %v565, 0
        %569 = vmatprep.subr.bf16.mxu0 0
        %570 = vmatpush1.bf16.msra.mxu0 %v560
        %571 = vmatprep.subr.bf16.mxu0 0
        %572 = vmatpush1.bf16.msra.mxu0 0
        %573 = vmatprep.subr.bf16.mxu0 0
        %574 = vmatpush1.bf16.msra.mxu0 0
        %575 = vmatprep.subr.bf16.mxu0 0
        %576 = vmatpush1.bf16.msra.mxu0 0
        %577 = vmatprep.subr.bf16.mxu0 0
        %578 = vmatpush1.bf16.msra.mxu0 0
        %579 = vmatprep.subr.bf16.mxu0 0
        %580 = vmatpush1.bf16.msra.mxu0 0
        %581 = vmatprep.subr.bf16.mxu0 0
        %582 = vmatpush1.bf16.msra.mxu0 0
        %583 = vmatprep.subr.bf16.mxu0 0
        %584 = vmatpush1.bf16.msra.mxu0 0
        %585 = vmatprep.subr.bf16.mxu0 0
        %586 = vmatpush1.bf16.msra.mxu0 0
        %587 = vmatprep.subr.bf16.mxu0 0
        %588 = vmatpush1.bf16.msra.mxu0 0
        %589 = vmatprep.subr.bf16.mxu0 0
        %590 = vmatpush1.bf16.msra.mxu0 0
        %591 = vmatprep.subr.bf16.mxu0 0
        %592 = vmatpush1.bf16.msra.mxu0 0
        %593 = vmatprep.subr.bf16.mxu0 0
        %594 = vmatpush1.bf16.msra.mxu0 0
        %595 = vmatprep.subr.bf16.mxu0 0
        %596 = vmatpush1.bf16.msra.mxu0 0
        %597 = vmatprep.subr.bf16.mxu0 0
        %598 = vmatpush1.bf16.msra.mxu0 0
        %599 = vmatprep.subr.bf16.mxu0 0
        %600 = vmatpush1.bf16.msra.mxu0 0
        %601 = vmatprep.mubr.bf16.mxu0 0
        %602 = vmatmul.mubr.bf16.gmra.mrb[0].mxu0 %v567
        %v603 = vpop.f32.mrb[0].mxu0
        %v604 = vadd.f32 0.0, %v603
        %v605 = vpop.f32.mrb[0].mxu0
        %v606 = vpop.f32.mrb[0].mxu0
        %v607 = vadd.f32 0.0, %v606
        %v608 = vpop.f32.mrb[0].mxu0
        %609 = vdwg.mxu0
        %v610 = vpack.c.bf16 %v557, %v556
        %v613 = vunpack.c.l.b16 %v320
        %v614 = vunpack.c.l.b16 %v321
        %v615 = vpack.c.b16 %v614, %v613
        %v617 = vsel %vm362, %v615, 0
        %619 = vmatprep.subr.bf16.mxu0 0
        %620 = vmatpush1.bf16.msra.mxu0 %v610
        %621 = vmatprep.subr.bf16.mxu0 0
        %622 = vmatpush1.bf16.msra.mxu0 0
        %623 = vmatprep.subr.bf16.mxu0 0
        %624 = vmatpush1.bf16.msra.mxu0 0
        %625 = vmatprep.subr.bf16.mxu0 0
        %626 = vmatpush1.bf16.msra.mxu0 0
        %627 = vmatprep.subr.bf16.mxu0 0
        %628 = vmatpush1.bf16.msra.mxu0 0
        %629 = vmatprep.subr.bf16.mxu0 0
        %630 = vmatpush1.bf16.msra.mxu0 0
        %631 = vmatprep.subr.bf16.mxu0 0
        %632 = vmatpush1.bf16.msra.mxu0 0
        %633 = vmatprep.subr.bf16.mxu0 0
        %634 = vmatpush1.bf16.msra.mxu0 0
        %635 = vmatprep.subr.bf16.mxu0 0
        %636 = vmatpush1.bf16.msra.mxu0 0
        %637 = vmatprep.subr.bf16.mxu0 0
        %638 = vmatpush1.bf16.msra.mxu0 0
        %639 = vmatprep.subr.bf16.mxu0 0
        %640 = vmatpush1.bf16.msra.mxu0 0
        %641 = vmatprep.subr.bf16.mxu0 0
        %642 = vmatpush1.bf16.msra.mxu0 0
        %643 = vmatprep.subr.bf16.mxu0 0
        %644 = vmatpush1.bf16.msra.mxu0 0
        %645 = vmatprep.subr.bf16.mxu0 0
        %646 = vmatpush1.bf16.msra.mxu0 0
        %647 = vmatprep.subr.bf16.mxu0 0
        %648 = vmatpush1.bf16.msra.mxu0 0
        %649 = vmatprep.subr.bf16.mxu0 0
        %650 = vmatpush1.bf16.msra.mxu0 0
        %651 = vmatprep.mubr.bf16.mxu0 0
        %652 = vmatmul.mubr.bf16.gmra.mrb[0].mxu0 %v617
        %v653 = vpop.f32.mrb[0].mxu0
        %v654 = vadd.f32 0.0, %v653
        %v655 = vpop.f32.mrb[0].mxu0
        %v656 = vpop.f32.mrb[0].mxu0
        %v657 = vadd.f32 0.0, %v656
        %v658 = vpop.f32.mrb[0].mxu0
        %659 = vdwg.mxu0
        %v660 = vadd.f32 %v548, %v556
        %v661 = vadd.f32 %v549, %v557
        %v662 = vpack.c.bf16 %v661, %v660
        %v665 = vunpack.c.l.b16 %v323
        %v666 = vunpack.c.l.b16 %v324
        %v667 = vpack.c.b16 %v666, %v665
        %v669 = vsel %vm362, %v667, 0
        %671 = vmatprep.subr.bf16.mxu0 0
        %672 = vmatpush1.bf16.msra.mxu0 %v662
        %673 = vmatprep.subr.bf16.mxu0 0
        %674 = vmatpush1.bf16.msra.mxu0 0
        %675 = vmatprep.subr.bf16.mxu0 0
        %676 = vmatpush1.bf16.msra.mxu0 0
        %677 = vmatprep.subr.bf16.mxu0 0
        %678 = vmatpush1.bf16.msra.mxu0 0
        %679 = vmatprep.subr.bf16.mxu0 0
        %680 = vmatpush1.bf16.msra.mxu0 0
        %681 = vmatprep.subr.bf16.mxu0 0
        %682 = vmatpush1.bf16.msra.mxu0 0
        %683 = vmatprep.subr.bf16.mxu0 0
        %684 = vmatpush1.bf16.msra.mxu0 0
        %685 = vmatprep.subr.bf16.mxu0 0
        %686 = vmatpush1.bf16.msra.mxu0 0
        %687 = vmatprep.subr.bf16.mxu0 0
        %688 = vmatpush1.bf16.msra.mxu0 0
        %689 = vmatprep.subr.bf16.mxu0 0
        %690 = vmatpush1.bf16.msra.mxu0 0
        %691 = vmatprep.subr.bf16.mxu0 0
        %692 = vmatpush1.bf16.msra.mxu0 0
        %693 = vmatprep.subr.bf16.mxu0 0
        %694 = vmatpush1.bf16.msra.mxu0 0
        %695 = vmatprep.subr.bf16.mxu0 0
        %696 = vmatpush1.bf16.msra.mxu0 0
        %697 = vmatprep.subr.bf16.mxu0 0
        %698 = vmatpush1.bf16.msra.mxu0 0
        %699 = vmatprep.subr.bf16.mxu0 0
        %700 = vmatpush1.bf16.msra.mxu0 0
        %701 = vmatprep.subr.bf16.mxu0 0
        %702 = vmatpush1.bf16.msra.mxu0 0
        %703 = vmatprep.mubr.bf16.mxu0 0
        %704 = vmatmul.mubr.bf16.gmra.mrb[0].mxu0 %v669
        %v705 = vpop.f32.mrb[0].mxu0
        %v706 = vadd.f32 0.0, %v705
        %v707 = vpop.f32.mrb[0].mxu0
        %v708 = vpop.f32.mrb[0].mxu0
        %v709 = vadd.f32 0.0, %v708
        %v710 = vpop.f32.mrb[0].mxu0
        %711 = vdwg.mxu0
        %v712 = vsub.f32 %v604, %v654
        %v713 = vsub.f32 %v607, %v657
        %v714 = vsub.f32 %v706, %v604
        %v715 = vsub.f32 %v709, %v607
        %v716 = vsub.f32 %v714, %v654
        %v717 = vsub.f32 %v715, %v657
        %v718 = vld [vmem:[%s305] sm:$0xff]
        %v719 = vld [vmem:[%s305 + $0x8] sm:$0xff]
        %v720 = vmul.f32 %v712, %v343
        %v721 = vmul.f32 %v713, %v344
        %v722 = vadd.f32 %v718, %v720
        %v723 = vadd.f32 %v719, %v721
        %s724 = scalar_lea.vmem %s305, 16
        %v725 = vld [vmem:[%s724] sm:$0xff]
        %v726 = vld [vmem:[%s724 + $0x8] sm:$0xff]
        %v727 = vmul.f32 %v716, %v343
        %v728 = vmul.f32 %v717, %v344
        %v729 = vadd.f32 %v725, %v727
        %v730 = vadd.f32 %v726, %v728
        %v731 = vpack.c.bf16 %v723, %v722
        %v734 = vunpack.c.l.b16 %v325
        %v735 = vunpack.c.l.b16 %v326
        %v736 = vpack.c.b16 %v735, %v734
        %v738 = vsel %vm362, %v736, 0
        %740 = vmatprep.subr.bf16.mxu0 0
        %741 = vmatpush1.bf16.msra.mxu0 %v731
        %742 = vmatprep.subr.bf16.mxu0 0
        %743 = vmatpush1.bf16.msra.mxu0 0
        %744 = vmatprep.subr.bf16.mxu0 0
        %745 = vmatpush1.bf16.msra.mxu0 0
        %746 = vmatprep.subr.bf16.mxu0 0
        %747 = vmatpush1.bf16.msra.mxu0 0
        %748 = vmatprep.subr.bf16.mxu0 0
        %749 = vmatpush1.bf16.msra.mxu0 0
        %750 = vmatprep.subr.bf16.mxu0 0
        %751 = vmatpush1.bf16.msra.mxu0 0
        %752 = vmatprep.subr.bf16.mxu0 0
        %753 = vmatpush1.bf16.msra.mxu0 0
        %754 = vmatprep.subr.bf16.mxu0 0
        %755 = vmatpush1.bf16.msra.mxu0 0
        %756 = vmatprep.subr.bf16.mxu0 0
        %757 = vmatpush1.bf16.msra.mxu0 0
        %758 = vmatprep.subr.bf16.mxu0 0
        %759 = vmatpush1.bf16.msra.mxu0 0
        %760 = vmatprep.subr.bf16.mxu0 0
        %761 = vmatpush1.bf16.msra.mxu0 0
        %762 = vmatprep.subr.bf16.mxu0 0
        %763 = vmatpush1.bf16.msra.mxu0 0
        %764 = vmatprep.subr.bf16.mxu0 0
        %765 = vmatpush1.bf16.msra.mxu0 0
        %766 = vmatprep.subr.bf16.mxu0 0
        %767 = vmatpush1.bf16.msra.mxu0 0
        %768 = vmatprep.subr.bf16.mxu0 0
        %769 = vmatpush1.bf16.msra.mxu0 0
        %770 = vmatprep.subr.bf16.mxu0 0
        %771 = vmatpush1.bf16.msra.mxu0 0
        %772 = vmatprep.mubr.bf16.mxu0 0
        %773 = vmatmul.mubr.bf16.gmra.mrb[0].mxu0 %v738
        %v774 = vpop.f32.mrb[0].mxu0
        %v775 = vadd.f32 0.0, %v774
        %v776 = vpop.f32.mrb[0].mxu0
        %v777 = vpop.f32.mrb[0].mxu0
        %v778 = vadd.f32 0.0, %v777
        %v779 = vpop.f32.mrb[0].mxu0
        %780 = vdwg.mxu0
        %v781 = vpack.c.bf16 %v730, %v729
        %v784 = vunpack.c.l.b16 %v328
        %v785 = vunpack.c.l.b16 %v329
        %v786 = vpack.c.b16 %v785, %v784
        %v788 = vsel %vm362, %v786, 0
        %790 = vmatprep.subr.bf16.mxu0 0
        %791 = vmatpush1.bf16.msra.mxu0 %v781
        %792 = vmatprep.subr.bf16.mxu0 0
        %793 = vmatpush1.bf16.msra.mxu0 0
        %794 = vmatprep.subr.bf16.mxu0 0
        %795 = vmatpush1.bf16.msra.mxu0 0
        %796 = vmatprep.subr.bf16.mxu0 0
        %797 = vmatpush1.bf16.msra.mxu0 0
        %798 = vmatprep.subr.bf16.mxu0 0
        %799 = vmatpush1.bf16.msra.mxu0 0
        %800 = vmatprep.subr.bf16.mxu0 0
        %801 = vmatpush1.bf16.msra.mxu0 0
        %802 = vmatprep.subr.bf16.mxu0 0
        %803 = vmatpush1.bf16.msra.mxu0 0
        %804 = vmatprep.subr.bf16.mxu0 0
        %805 = vmatpush1.bf16.msra.mxu0 0
        %806 = vmatprep.subr.bf16.mxu0 0
        %807 = vmatpush1.bf16.msra.mxu0 0
        %808 = vmatprep.subr.bf16.mxu0 0
        %809 = vmatpush1.bf16.msra.mxu0 0
        %810 = vmatprep.subr.bf16.mxu0 0
        %811 = vmatpush1.bf16.msra.mxu0 0
        %812 = vmatprep.subr.bf16.mxu0 0
        %813 = vmatpush1.bf16.msra.mxu0 0
        %814 = vmatprep.subr.bf16.mxu0 0
        %815 = vmatpush1.bf16.msra.mxu0 0
        %816 = vmatprep.subr.bf16.mxu0 0
        %817 = vmatpush1.bf16.msra.mxu0 0
        %818 = vmatprep.subr.bf16.mxu0 0
        %819 = vmatpush1.bf16.msra.mxu0 0
        %820 = vmatprep.subr.bf16.mxu0 0
        %821 = vmatpush1.bf16.msra.mxu0 0
        %822 = vmatprep.mubr.bf16.mxu0 0
        %823 = vmatmul.mubr.bf16.gmra.mrb[0].mxu0 %v788
        %v824 = vpop.f32.mrb[0].mxu0
        %v825 = vadd.f32 0.0, %v824
        %v826 = vpop.f32.mrb[0].mxu0
        %v827 = vpop.f32.mrb[0].mxu0
        %v828 = vadd.f32 0.0, %v827
        %v829 = vpop.f32.mrb[0].mxu0
        %830 = vdwg.mxu0
        %v831 = vadd.f32 %v722, %v729
        %v832 = vadd.f32 %v723, %v730
        %v833 = vpack.c.bf16 %v832, %v831
        %v836 = vunpack.c.l.b16 %v331
        %v837 = vunpack.c.l.b16 %v332
        %v838 = vpack.c.b16 %v837, %v836
        %v840 = vsel %vm362, %v838, 0
        %842 = vmatprep.subr.bf16.mxu0 0
        %843 = vmatpush1.bf16.msra.mxu0 %v833
        %844 = vmatprep.subr.bf16.mxu0 0
        %845 = vmatpush1.bf16.msra.mxu0 0
        %846 = vmatprep.subr.bf16.mxu0 0
        %847 = vmatpush1.bf16.msra.mxu0 0
        %848 = vmatprep.subr.bf16.mxu0 0
        %849 = vmatpush1.bf16.msra.mxu0 0
        %850 = vmatprep.subr.bf16.mxu0 0
        %851 = vmatpush1.bf16.msra.mxu0 0
        %852 = vmatprep.subr.bf16.mxu0 0
        %853 = vmatpush1.bf16.msra.mxu0 0
        %854 = vmatprep.subr.bf16.mxu0 0
        %855 = vmatpush1.bf16.msra.mxu0 0
        %856 = vmatprep.subr.bf16.mxu0 0
        %857 = vmatpush1.bf16.msra.mxu0 0
        %858 = vmatprep.subr.bf16.mxu0 0
        %859 = vmatpush1.bf16.msra.mxu0 0
        %860 = vmatprep.subr.bf16.mxu0 0
        %861 = vmatpush1.bf16.msra.mxu0 0
        %862 = vmatprep.subr.bf16.mxu0 0
        %863 = vmatpush1.bf16.msra.mxu0 0
        %864 = vmatprep.subr.bf16.mxu0 0
        %865 = vmatpush1.bf16.msra.mxu0 0
        %866 = vmatprep.subr.bf16.mxu0 0
        %867 = vmatpush1.bf16.msra.mxu0 0
        %868 = vmatprep.subr.bf16.mxu0 0
        %869 = vmatpush1.bf16.msra.mxu0 0
        %870 = vmatprep.subr.bf16.mxu0 0
        %871 = vmatpush1.bf16.msra.mxu0 0
        %872 = vmatprep.subr.bf16.mxu0 0
        %873 = vmatpush1.bf16.msra.mxu0 0
        %874 = vmatprep.mubr.bf16.mxu0 0
        %875 = vmatmul.mubr.bf16.gmra.mrb[0].mxu0 %v840
        %v876 = vpop.f32.mrb[0].mxu0
        %v877 = vadd.f32 0.0, %v876
        %v878 = vpop.f32.mrb[0].mxu0
        %v879 = vpop.f32.mrb[0].mxu0
        %v880 = vadd.f32 0.0, %v879
        %v881 = vpop.f32.mrb[0].mxu0
        %882 = vdwg.mxu0
        %v883 = vsub.f32 %v775, %v825
        %v884 = vsub.f32 %v778, %v828
        %v885 = vsub.f32 %v877, %v775
        %v886 = vsub.f32 %v880, %v778
        %v887 = vsub.f32 %v885, %v825
        %v888 = vsub.f32 %v886, %v828
        %v889 = vpack.c.bf16 %v884, %v883
        %v892 = vunpack.c.l.b16 %v333
        %v893 = vunpack.c.l.b16 %v334
        %v894 = vpack.c.b16 %v893, %v892
        %v897 = vsel %vm362, %v889, 0
        %899 = vmatprep.subr.bf16.mxu0 0
        %900 = vmatpush1.bf16.msra.mxu0 %v894
        %901 = vmatprep.subr.bf16.mxu0 0
        %902 = vmatpush1.bf16.msra.mxu0 0
        %903 = vmatprep.subr.bf16.mxu0 0
        %904 = vmatpush1.bf16.msra.mxu0 0
        %905 = vmatprep.subr.bf16.mxu0 0
        %906 = vmatpush1.bf16.msra.mxu0 0
        %907 = vmatprep.subr.bf16.mxu0 0
        %908 = vmatpush1.bf16.msra.mxu0 0
        %909 = vmatprep.subr.bf16.mxu0 0
        %910 = vmatpush1.bf16.msra.mxu0 0
        %911 = vmatprep.subr.bf16.mxu0 0
        %912 = vmatpush1.bf16.msra.mxu0 0
        %913 = vmatprep.subr.bf16.mxu0 0
        %914 = vmatpush1.bf16.msra.mxu0 0
        %915 = vmatprep.subr.bf16.mxu0 0
        %916 = vmatpush1.bf16.msra.mxu0 0
        %917 = vmatprep.subr.bf16.mxu0 0
        %918 = vmatpush1.bf16.msra.mxu0 0
        %919 = vmatprep.subr.bf16.mxu0 0
        %920 = vmatpush1.bf16.msra.mxu0 0
        %921 = vmatprep.subr.bf16.mxu0 0
        %922 = vmatpush1.bf16.msra.mxu0 0
        %923 = vmatprep.subr.bf16.mxu0 0
        %924 = vmatpush1.bf16.msra.mxu0 0
        %925 = vmatprep.subr.bf16.mxu0 0
        %926 = vmatpush1.bf16.msra.mxu0 0
        %927 = vmatprep.subr.bf16.mxu0 0
        %928 = vmatpush1.bf16.msra.mxu0 0
        %929 = vmatprep.subr.bf16.mxu0 0
        %930 = vmatpush1.bf16.msra.mxu0 0
        %931 = vmatprep.mubr.bf16.mxu0 0
        %932 = vmatmul.mubr.bf16.gmra.mrb[0].mxu0 %v897
        %v933 = vpop.f32.mrb[0].mxu0
        %v934 = vadd.f32 0.0, %v933
        %v935 = vpop.f32.mrb[0].mxu0
        %v936 = vpop.f32.mrb[0].mxu0
        %v937 = vadd.f32 0.0, %v936
        %v938 = vpop.f32.mrb[0].mxu0
        %939 = vdwg.mxu0
        %v940 = vpack.c.bf16 %v888, %v887
        %v943 = vunpack.c.l.b16 %v336
        %v944 = vunpack.c.l.b16 %v337
        %v945 = vpack.c.b16 %v944, %v943
        %v948 = vsel %vm362, %v940, 0
        %950 = vmatprep.subr.bf16.mxu0 0
        %951 = vmatpush1.bf16.msra.mxu0 %v945
        %952 = vmatprep.subr.bf16.mxu0 0
        %953 = vmatpush1.bf16.msra.mxu0 0
        %954 = vmatprep.subr.bf16.mxu0 0
        %955 = vmatpush1.bf16.msra.mxu0 0
        %956 = vmatprep.subr.bf16.mxu0 0
        %957 = vmatpush1.bf16.msra.mxu0 0
        %958 = vmatprep.subr.bf16.mxu0 0
        %959 = vmatpush1.bf16.msra.mxu0 0
        %960 = vmatprep.subr.bf16.mxu0 0
        %961 = vmatpush1.bf16.msra.mxu0 0
        %962 = vmatprep.subr.bf16.mxu0 0
        %963 = vmatpush1.bf16.msra.mxu0 0
        %964 = vmatprep.subr.bf16.mxu0 0
        %965 = vmatpush1.bf16.msra.mxu0 0
        %966 = vmatprep.subr.bf16.mxu0 0
        %967 = vmatpush1.bf16.msra.mxu0 0
        %968 = vmatprep.subr.bf16.mxu0 0
        %969 = vmatpush1.bf16.msra.mxu0 0
        %970 = vmatprep.subr.bf16.mxu0 0
        %971 = vmatpush1.bf16.msra.mxu0 0
        %972 = vmatprep.subr.bf16.mxu0 0
        %973 = vmatpush1.bf16.msra.mxu0 0
        %974 = vmatprep.subr.bf16.mxu0 0
        %975 = vmatpush1.bf16.msra.mxu0 0
        %976 = vmatprep.subr.bf16.mxu0 0
        %977 = vmatpush1.bf16.msra.mxu0 0
        %978 = vmatprep.subr.bf16.mxu0 0
        %979 = vmatpush1.bf16.msra.mxu0 0
        %980 = vmatprep.subr.bf16.mxu0 0
        %981 = vmatpush1.bf16.msra.mxu0 0
        %982 = vmatprep.mubr.bf16.mxu0 0
        %983 = vmatmul.mubr.bf16.gmra.mrb[0].mxu0 %v948
        %v984 = vpop.f32.mrb[0].mxu0
        %v985 = vadd.f32 0.0, %v984
        %v986 = vpop.f32.mrb[0].mxu0
        %v987 = vpop.f32.mrb[0].mxu0
        %v988 = vadd.f32 0.0, %v987
        %v989 = vpop.f32.mrb[0].mxu0
        %990 = vdwg.mxu0
        %v991 = vadd.f32 %v883, %v887
        %v992 = vadd.f32 %v884, %v888
        %v993 = vpack.c.bf16 %v992, %v991
        %v996 = vunpack.c.l.b16 %v339
        %v997 = vunpack.c.l.b16 %v340
        %v998 = vpack.c.b16 %v997, %v996
        %v1001 = vsel %vm362, %v993, 0
        %1003 = vmatprep.subr.bf16.mxu0 0
        %1004 = vmatpush1.bf16.msra.mxu0 %v998
        %1005 = vmatprep.subr.bf16.mxu0 0
        %1006 = vmatpush1.bf16.msra.mxu0 0
        %1007 = vmatprep.subr.bf16.mxu0 0
        %1008 = vmatpush1.bf16.msra.mxu0 0
        %1009 = vmatprep.subr.bf16.mxu0 0
        %1010 = vmatpush1.bf16.msra.mxu0 0
        %1011 = vmatprep.subr.bf16.mxu0 0
        %1012 = vmatpush1.bf16.msra.mxu0 0
        %1013 = vmatprep.subr.bf16.mxu0 0
        %1014 = vmatpush1.bf16.msra.mxu0 0
        %1015 = vmatprep.subr.bf16.mxu0 0
        %1016 = vmatpush1.bf16.msra.mxu0 0
        %1017 = vmatprep.subr.bf16.mxu0 0
        %1018 = vmatpush1.bf16.msra.mxu0 0
        %1019 = vmatprep.subr.bf16.mxu0 0
        %1020 = vmatpush1.bf16.msra.mxu0 0
        %1021 = vmatprep.subr.bf16.mxu0 0
        %1022 = vmatpush1.bf16.msra.mxu0 0
        %1023 = vmatprep.subr.bf16.mxu0 0
        %1024 = vmatpush1.bf16.msra.mxu0 0
        %1025 = vmatprep.subr.bf16.mxu0 0
        %1026 = vmatpush1.bf16.msra.mxu0 0
        %1027 = vmatprep.subr.bf16.mxu0 0
        %1028 = vmatpush1.bf16.msra.mxu0 0
        %1029 = vmatprep.subr.bf16.mxu0 0
        %1030 = vmatpush1.bf16.msra.mxu0 0
        %1031 = vmatprep.subr.bf16.mxu0 0
        %1032 = vmatpush1.bf16.msra.mxu0 0
        %1033 = vmatprep.subr.bf16.mxu0 0
        %1034 = vmatpush1.bf16.msra.mxu0 0
        %1035 = vmatprep.mubr.bf16.mxu0 0
        %1036 = vmatmul.mubr.bf16.gmra.mrb[0].mxu0 %v1001
        %v1037 = vpop.f32.mrb[0].mxu0
        %v1038 = vadd.f32 0.0, %v1037
        %v1039 = vpop.f32.mrb[0].mxu0
        %v1040 = vpop.f32.mrb[0].mxu0
        %v1041 = vadd.f32 0.0, %v1040
        %v1042 = vpop.f32.mrb[0].mxu0
        %1043 = vdwg.mxu0
        %v1044 = vsub.f32 %v934, %v985
        %v1045 = vsub.f32 %v937, %v988
        %v1046 = vsub.f32 %v1038, %v934
        %v1047 = vsub.f32 %v1041, %v937
        %v1048 = vsub.f32 %v1046, %v985
        %v1049 = vsub.f32 %v1047, %v988
        %1050 = vst.msk [vmem:[%s292] sm:$0xff] %vm362, %v1044
        %1051 = vst.msk [vmem:[%s292 + $0x8] sm:$0xff] %vm362, %v1045
        %s1052 = scalar_lea.vmem %s292, 16 [#allocation2]
        %1053 = vst.msk [vmem:[%s1052] sm:$0xff] %vm362, %v1048
        %1054 = vst.msk [vmem:[%s1052 + $0x8] sm:$0xff] %vm362, %v1049
        %v1055 = vpack.c.bf16 %v551, %v550
        %1056 = vmatprep.subr.bf16.mxu0 0
        %1057 = vmatpush1.bf16.msra.mxu0 %v1055
        %1058 = vmatprep.subr.bf16.mxu0 0
        %1059 = vmatpush1.bf16.msra.mxu0 0
        %1060 = vmatprep.subr.bf16.mxu0 0
        %1061 = vmatpush1.bf16.msra.mxu0 0
        %1062 = vmatprep.subr.bf16.mxu0 0
        %1063 = vmatpush1.bf16.msra.mxu0 0
        %1064 = vmatprep.subr.bf16.mxu0 0
        %1065 = vmatpush1.bf16.msra.mxu0 0
        %1066 = vmatprep.subr.bf16.mxu0 0
        %1067 = vmatpush1.bf16.msra.mxu0 0
        %1068 = vmatprep.subr.bf16.mxu0 0
        %1069 = vmatpush1.bf16.msra.mxu0 0
        %1070 = vmatprep.subr.bf16.mxu0 0
        %1071 = vmatpush1.bf16.msra.mxu0 0
        %1072 = vmatprep.subr.bf16.mxu0 0
        %1073 = vmatpush1.bf16.msra.mxu0 0
        %1074 = vmatprep.subr.bf16.mxu0 0
        %1075 = vmatpush1.bf16.msra.mxu0 0
        %1076 = vmatprep.subr.bf16.mxu0 0
        %1077 = vmatpush1.bf16.msra.mxu0 0
        %1078 = vmatprep.subr.bf16.mxu0 0
        %1079 = vmatpush1.bf16.msra.mxu0 0
        %1080 = vmatprep.subr.bf16.mxu0 0
        %1081 = vmatpush1.bf16.msra.mxu0 0
        %1082 = vmatprep.subr.bf16.mxu0 0
        %1083 = vmatpush1.bf16.msra.mxu0 0
        %1084 = vmatprep.subr.bf16.mxu0 0
        %1085 = vmatpush1.bf16.msra.mxu0 0
        %1086 = vmatprep.subr.bf16.mxu0 0
        %1087 = vmatpush1.bf16.msra.mxu0 0
        %1088 = vmatprep.mubr.bf16.mxu0 0
        %1089 = vmatmul.mubr.bf16.gmra.mrb[0].mxu0 %v567
        %v1090 = vpop.f32.mrb[0].mxu0
        %v1091 = vadd.f32 0.0, %v1090
        %v1092 = vpop.f32.mrb[0].mxu0
        %v1093 = vpop.f32.mrb[0].mxu0
        %v1094 = vadd.f32 0.0, %v1093
        %v1095 = vpop.f32.mrb[0].mxu0
        %1096 = vdwg.mxu0
        %v1097 = vpack.c.bf16 %v559, %v558
        %1098 = vmatprep.subr.bf16.mxu0 0
        %1099 = vmatpush1.bf16.msra.mxu0 %v1097
        %1100 = vmatprep.subr.bf16.mxu0 0
        %1101 = vmatpush1.bf16.msra.mxu0 0
        %1102 = vmatprep.subr.bf16.mxu0 0
        %1103 = vmatpush1.bf16.msra.mxu0 0
        %1104 = vmatprep.subr.bf16.mxu0 0
        %1105 = vmatpush1.bf16.msra.mxu0 0
        %1106 = vmatprep.subr.bf16.mxu0 0
        %1107 = vmatpush1.bf16.msra.mxu0 0
        %1108 = vmatprep.subr.bf16.mxu0 0
        %1109 = vmatpush1.bf16.msra.mxu0 0
        %1110 = vmatprep.subr.bf16.mxu0 0
        %1111 = vmatpush1.bf16.msra.mxu0 0
        %1112 = vmatprep.subr.bf16.mxu0 0
        %1113 = vmatpush1.bf16.msra.mxu0 0
        %1114 = vmatprep.subr.bf16.mxu0 0
        %1115 = vmatpush1.bf16.msra.mxu0 0
        %1116 = vmatprep.subr.bf16.mxu0 0
        %1117 = vmatpush1.bf16.msra.mxu0 0
        %1118 = vmatprep.subr.bf16.mxu0 0
        %1119 = vmatpush1.bf16.msra.mxu0 0
        %1120 = vmatprep.subr.bf16.mxu0 0
        %1121 = vmatpush1.bf16.msra.mxu0 0
        %1122 = vmatprep.subr.bf16.mxu0 0
        %1123 = vmatpush1.bf16.msra.mxu0 0
        %1124 = vmatprep.subr.bf16.mxu0 0
        %1125 = vmatpush1.bf16.msra.mxu0 0
        %1126 = vmatprep.subr.bf16.mxu0 0
        %1127 = vmatpush1.bf16.msra.mxu0 0
        %1128 = vmatprep.subr.bf16.mxu0 0
        %1129 = vmatpush1.bf16.msra.mxu0 0
        %1130 = vmatprep.mubr.bf16.mxu0 0
        %1131 = vmatmul.mubr.bf16.gmra.mrb[0].mxu0 %v617
        %v1132 = vpop.f32.mrb[0].mxu0
        %v1133 = vadd.f32 0.0, %v1132
        %v1134 = vpop.f32.mrb[0].mxu0
        %v1135 = vpop.f32.mrb[0].mxu0
        %v1136 = vadd.f32 0.0, %v1135
        %v1137 = vpop.f32.mrb[0].mxu0
        %1138 = vdwg.mxu0
        %v1139 = vadd.f32 %v550, %v558
        %v1140 = vadd.f32 %v551, %v559
        %v1141 = vpack.c.bf16 %v1140, %v1139
        %1142 = vmatprep.subr.bf16.mxu0 0
        %1143 = vmatpush1.bf16.msra.mxu0 %v1141
        %1144 = vmatprep.subr.bf16.mxu0 0
        %1145 = vmatpush1.bf16.msra.mxu0 0
        %1146 = vmatprep.subr.bf16.mxu0 0
        %1147 = vmatpush1.bf16.msra.mxu0 0
        %1148 = vmatprep.subr.bf16.mxu0 0
        %1149 = vmatpush1.bf16.msra.mxu0 0
        %1150 = vmatprep.subr.bf16.mxu0 0
        %1151 = vmatpush1.bf16.msra.mxu0 0
        %1152 = vmatprep.subr.bf16.mxu0 0
        %1153 = vmatpush1.bf16.msra.mxu0 0
        %1154 = vmatprep.subr.bf16.mxu0 0
        %1155 = vmatpush1.bf16.msra.mxu0 0
        %1156 = vmatprep.subr.bf16.mxu0 0
        %1157 = vmatpush1.bf16.msra.mxu0 0
        %1158 = vmatprep.subr.bf16.mxu0 0
        %1159 = vmatpush1.bf16.msra.mxu0 0
        %1160 = vmatprep.subr.bf16.mxu0 0
        %1161 = vmatpush1.bf16.msra.mxu0 0
        %1162 = vmatprep.subr.bf16.mxu0 0
        %1163 = vmatpush1.bf16.msra.mxu0 0
        %1164 = vmatprep.subr.bf16.mxu0 0
        %1165 = vmatpush1.bf16.msra.mxu0 0
        %1166 = vmatprep.subr.bf16.mxu0 0
        %1167 = vmatpush1.bf16.msra.mxu0 0
        %1168 = vmatprep.subr.bf16.mxu0 0
        %1169 = vmatpush1.bf16.msra.mxu0 0
        %1170 = vmatprep.subr.bf16.mxu0 0
        %1171 = vmatpush1.bf16.msra.mxu0 0
        %1172 = vmatprep.subr.bf16.mxu0 0
        %1173 = vmatpush1.bf16.msra.mxu0 0
        %1174 = vmatprep.mubr.bf16.mxu0 0
        %1175 = vmatmul.mubr.bf16.gmra.mrb[0].mxu0 %v669
        %v1176 = vpop.f32.mrb[0].mxu0
        %v1177 = vadd.f32 0.0, %v1176
        %v1178 = vpop.f32.mrb[0].mxu0
        %v1179 = vpop.f32.mrb[0].mxu0
        %v1180 = vadd.f32 0.0, %v1179
        %v1181 = vpop.f32.mrb[0].mxu0
        %1182 = vdwg.mxu0
        %v1183 = vsub.f32 %v1091, %v1133
        %v1184 = vsub.f32 %v1094, %v1136
        %v1185 = vsub.f32 %v1177, %v1091
        %v1186 = vsub.f32 %v1180, %v1094
        %v1187 = vsub.f32 %v1185, %v1133
        %v1188 = vsub.f32 %v1186, %v1136
        %s1189 = scalar_lea.vmem %s305, 32
        %v1190 = vld [vmem:[%s1189] sm:$0xff]
        %v1191 = vld [vmem:[%s1189 + $0x8] sm:$0xff]
        %v1192 = vmul.f32 %v1183, %v343
        %v1193 = vmul.f32 %v1184, %v344
        %v1194 = vadd.f32 %v1190, %v1192
        %v1195 = vadd.f32 %v1191, %v1193
        %s1196 = scalar_lea.vmem %s305, 48
        %v1197 = vld [vmem:[%s1196] sm:$0xff]
        %v1198 = vld [vmem:[%s1196 + $0x8] sm:$0xff]
        %v1199 = vmul.f32 %v1187, %v343
        %v1200 = vmul.f32 %v1188, %v344
        %v1201 = vadd.f32 %v1197, %v1199
        %v1202 = vadd.f32 %v1198, %v1200
        %v1203 = vpack.c.bf16 %v1195, %v1194
        %1204 = vmatprep.subr.bf16.mxu0 0
        %1205 = vmatpush1.bf16.msra.mxu0 %v1203
        %1206 = vmatprep.subr.bf16.mxu0 0
        %1207 = vmatpush1.bf16.msra.mxu0 0
        %1208 = vmatprep.subr.bf16.mxu0 0
        %1209 = vmatpush1.bf16.msra.mxu0 0
        %1210 = vmatprep.subr.bf16.mxu0 0
        %1211 = vmatpush1.bf16.msra.mxu0 0
        %1212 = vmatprep.subr.bf16.mxu0 0
        %1213 = vmatpush1.bf16.msra.mxu0 0
        %1214 = vmatprep.subr.bf16.mxu0 0
        %1215 = vmatpush1.bf16.msra.mxu0 0
        %1216 = vmatprep.subr.bf16.mxu0 0
        %1217 = vmatpush1.bf16.msra.mxu0 0
        %1218 = vmatprep.subr.bf16.mxu0 0
        %1219 = vmatpush1.bf16.msra.mxu0 0
        %1220 = vmatprep.subr.bf16.mxu0 0
        %1221 = vmatpush1.bf16.msra.mxu0 0
        %1222 = vmatprep.subr.bf16.mxu0 0
        %1223 = vmatpush1.bf16.msra.mxu0 0
        %1224 = vmatprep.subr.bf16.mxu0 0
        %1225 = vmatpush1.bf16.msra.mxu0 0
        %1226 = vmatprep.subr.bf16.mxu0 0
        %1227 = vmatpush1.bf16.msra.mxu0 0
        %1228 = vmatprep.subr.bf16.mxu0 0
        %1229 = vmatpush1.bf16.msra.mxu0 0
        %1230 = vmatprep.subr.bf16.mxu0 0
        %1231 = vmatpush1.bf16.msra.mxu0 0
        %1232 = vmatprep.subr.bf16.mxu0 0
        %1233 = vmatpush1.bf16.msra.mxu0 0
        %1234 = vmatprep.subr.bf16.mxu0 0
        %1235 = vmatpush1.bf16.msra.mxu0 0
        %1236 = vmatprep.mubr.bf16.mxu0 0
        %1237 = vmatmul.mubr.bf16.gmra.mrb[0].mxu0 %v738
        %v1238 = vpop.f32.mrb[0].mxu0
        %v1239 = vadd.f32 0.0, %v1238
        %v1240 = vpop.f32.mrb[0].mxu0
        %v1241 = vpop.f32.mrb[0].mxu0
        %v1242 = vadd.f32 0.0, %v1241
        %v1243 = vpop.f32.mrb[0].mxu0
        %1244 = vdwg.mxu0
        %v1245 = vpack.c.bf16 %v1202, %v1201
        %1246 = vmatprep.subr.bf16.mxu0 0
        %1247 = vmatpush1.bf16.msra.mxu0 %v1245
        %1248 = vmatprep.subr.bf16.mxu0 0
        %1249 = vmatpush1.bf16.msra.mxu0 0
        %1250 = vmatprep.subr.bf16.mxu0 0
        %1251 = vmatpush1.bf16.msra.mxu0 0
        %1252 = vmatprep.subr.bf16.mxu0 0
        %1253 = vmatpush1.bf16.msra.mxu0 0
        %1254 = vmatprep.subr.bf16.mxu0 0
        %1255 = vmatpush1.bf16.msra.mxu0 0
        %1256 = vmatprep.subr.bf16.mxu0 0
        %1257 = vmatpush1.bf16.msra.mxu0 0
        %1258 = vmatprep.subr.bf16.mxu0 0
        %1259 = vmatpush1.bf16.msra.mxu0 0
        %1260 = vmatprep.subr.bf16.mxu0 0
        %1261 = vmatpush1.bf16.msra.mxu0 0
        %1262 = vmatprep.subr.bf16.mxu0 0
        %1263 = vmatpush1.bf16.msra.mxu0 0
        %1264 = vmatprep.subr.bf16.mxu0 0
        %1265 = vmatpush1.bf16.msra.mxu0 0
        %1266 = vmatprep.subr.bf16.mxu0 0
        %1267 = vmatpush1.bf16.msra.mxu0 0
        %1268 = vmatprep.subr.bf16.mxu0 0
        %1269 = vmatpush1.bf16.msra.mxu0 0
        %1270 = vmatprep.subr.bf16.mxu0 0
        %1271 = vmatpush1.bf16.msra.mxu0 0
        %1272 = vmatprep.subr.bf16.mxu0 0
        %1273 = vmatpush1.bf16.msra.mxu0 0
        %1274 = vmatprep.subr.bf16.mxu0 0
        %1275 = vmatpush1.bf16.msra.mxu0 0
        %1276 = vmatprep.subr.bf16.mxu0 0
        %1277 = vmatpush1.bf16.msra.mxu0 0
        %1278 = vmatprep.mubr.bf16.mxu0 0
        %1279 = vmatmul.mubr.bf16.gmra.mrb[0].mxu0 %v788
        %v1280 = vpop.f32.mrb[0].mxu0
        %v1281 = vadd.f32 0.0, %v1280
        %v1282 = vpop.f32.mrb[0].mxu0
        %v1283 = vpop.f32.mrb[0].mxu0
        %v1284 = vadd.f32 0.0, %v1283
        %v1285 = vpop.f32.mrb[0].mxu0
        %1286 = vdwg.mxu0
        %v1287 = vadd.f32 %v1194, %v1201
        %v1288 = vadd.f32 %v1195, %v1202
        %v1289 = vpack.c.bf16 %v1288, %v1287
        %1290 = vmatprep.subr.bf16.mxu0 0
        %1291 = vmatpush1.bf16.msra.mxu0 %v1289
        %1292 = vmatprep.subr.bf16.mxu0 0
        %1293 = vmatpush1.bf16.msra.mxu0 0
        %1294 = vmatprep.subr.bf16.mxu0 0
        %1295 = vmatpush1.bf16.msra.mxu0 0
        %1296 = vmatprep.subr.bf16.mxu0 0
        %1297 = vmatpush1.bf16.msra.mxu0 0
        %1298 = vmatprep.subr.bf16.mxu0 0
        %1299 = vmatpush1.bf16.msra.mxu0 0
        %1300 = vmatprep.subr.bf16.mxu0 0
        %1301 = vmatpush1.bf16.msra.mxu0 0
        %1302 = vmatprep.subr.bf16.mxu0 0
        %1303 = vmatpush1.bf16.msra.mxu0 0
        %1304 = vmatprep.subr.bf16.mxu0 0
        %1305 = vmatpush1.bf16.msra.mxu0 0
        %1306 = vmatprep.subr.bf16.mxu0 0
        %1307 = vmatpush1.bf16.msra.mxu0 0
        %1308 = vmatprep.subr.bf16.mxu0 0
        %1309 = vmatpush1.bf16.msra.mxu0 0
        %1310 = vmatprep.subr.bf16.mxu0 0
        %1311 = vmatpush1.bf16.msra.mxu0 0
        %1312 = vmatprep.subr.bf16.mxu0 0
        %1313 = vmatpush1.bf16.msra.mxu0 0
        %1314 = vmatprep.subr.bf16.mxu0 0
        %1315 = vmatpush1.bf16.msra.mxu0 0
        %1316 = vmatprep.subr.bf16.mxu0 0
        %1317 = vmatpush1.bf16.msra.mxu0 0
        %1318 = vmatprep.subr.bf16.mxu0 0
        %1319 = vmatpush1.bf16.msra.mxu0 0
        %1320 = vmatprep.subr.bf16.mxu0 0
        %1321 = vmatpush1.bf16.msra.mxu0 0
        %1322 = vmatprep.mubr.bf16.mxu0 0
        %1323 = vmatmul.mubr.bf16.gmra.mrb[0].mxu0 %v840
        %v1324 = vpop.f32.mrb[0].mxu0
        %v1325 = vadd.f32 0.0, %v1324
        %v1326 = vpop.f32.mrb[0].mxu0
        %v1327 = vpop.f32.mrb[0].mxu0
        %v1328 = vadd.f32 0.0, %v1327
        %v1329 = vpop.f32.mrb[0].mxu0
        %1330 = vdwg.mxu0
        %v1331 = vsub.f32 %v1239, %v1281
        %v1332 = vsub.f32 %v1242, %v1284
        %v1333 = vsub.f32 %v1325, %v1239
        %v1334 = vsub.f32 %v1328, %v1242
        %v1335 = vsub.f32 %v1333, %v1281
        %v1336 = vsub.f32 %v1334, %v1284
        %v1337 = vpack.c.bf16 %v1332, %v1331
        %v1339 = vsel %vm362, %v1337, 0
        %1341 = vmatprep.subr.bf16.mxu0 0
        %1342 = vmatpush1.bf16.msra.mxu0 %v894
        %1343 = vmatprep.subr.bf16.mxu0 0
        %1344 = vmatpush1.bf16.msra.mxu0 0
        %1345 = vmatprep.subr.bf16.mxu0 0
        %1346 = vmatpush1.bf16.msra.mxu0 0
        %1347 = vmatprep.subr.bf16.mxu0 0
        %1348 = vmatpush1.bf16.msra.mxu0 0
        %1349 = vmatprep.subr.bf16.mxu0 0
        %1350 = vmatpush1.bf16.msra.mxu0 0
        %1351 = vmatprep.subr.bf16.mxu0 0
        %1352 = vmatpush1.bf16.msra.mxu0 0
        %1353 = vmatprep.subr.bf16.mxu0 0
        %1354 = vmatpush1.bf16.msra.mxu0 0
        %1355 = vmatprep.subr.bf16.mxu0 0
        %1356 = vmatpush1.bf16.msra.mxu0 0
        %1357 = vmatprep.subr.bf16.mxu0 0
        %1358 = vmatpush1.bf16.msra.mxu0 0
        %1359 = vmatprep.subr.bf16.mxu0 0
        %1360 = vmatpush1.bf16.msra.mxu0 0
        %1361 = vmatprep.subr.bf16.mxu0 0
        %1362 = vmatpush1.bf16.msra.mxu0 0
        %1363 = vmatprep.subr.bf16.mxu0 0
        %1364 = vmatpush1.bf16.msra.mxu0 0
        %1365 = vmatprep.subr.bf16.mxu0 0
        %1366 = vmatpush1.bf16.msra.mxu0 0
        %1367 = vmatprep.subr.bf16.mxu0 0
        %1368 = vmatpush1.bf16.msra.mxu0 0
        %1369 = vmatprep.subr.bf16.mxu0 0
        %1370 = vmatpush1.bf16.msra.mxu0 0
        %1371 = vmatprep.subr.bf16.mxu0 0
        %1372 = vmatpush1.bf16.msra.mxu0 0
        %1373 = vmatprep.mubr.bf16.mxu0 0
        %1374 = vmatmul.mubr.bf16.gmra.mrb[0].mxu0 %v1339
        %v1375 = vpop.f32.mrb[0].mxu0
        %v1376 = vadd.f32 0.0, %v1375
        %v1377 = vpop.f32.mrb[0].mxu0
        %v1378 = vpop.f32.mrb[0].mxu0
        %v1379 = vadd.f32 0.0, %v1378
        %v1380 = vpop.f32.mrb[0].mxu0
        %1381 = vdwg.mxu0
        %v1382 = vpack.c.bf16 %v1336, %v1335
        %v1384 = vsel %vm362, %v1382, 0
        %1386 = vmatprep.subr.bf16.mxu0 0
        %1387 = vmatpush1.bf16.msra.mxu0 %v945
        %1388 = vmatprep.subr.bf16.mxu0 0
        %1389 = vmatpush1.bf16.msra.mxu0 0
        %1390 = vmatprep.subr.bf16.mxu0 0
        %1391 = vmatpush1.bf16.msra.mxu0 0
        %1392 = vmatprep.subr.bf16.mxu0 0
        %1393 = vmatpush1.bf16.msra.mxu0 0
        %1394 = vmatprep.subr.bf16.mxu0 0
        %1395 = vmatpush1.bf16.msra.mxu0 0
        %1396 = vmatprep.subr.bf16.mxu0 0
        %1397 = vmatpush1.bf16.msra.mxu0 0
        %1398 = vmatprep.subr.bf16.mxu0 0
        %1399 = vmatpush1.bf16.msra.mxu0 0
        %1400 = vmatprep.subr.bf16.mxu0 0
        %1401 = vmatpush1.bf16.msra.mxu0 0
        %1402 = vmatprep.subr.bf16.mxu0 0
        %1403 = vmatpush1.bf16.msra.mxu0 0
        %1404 = vmatprep.subr.bf16.mxu0 0
        %1405 = vmatpush1.bf16.msra.mxu0 0
        %1406 = vmatprep.subr.bf16.mxu0 0
        %1407 = vmatpush1.bf16.msra.mxu0 0
        %1408 = vmatprep.subr.bf16.mxu0 0
        %1409 = vmatpush1.bf16.msra.mxu0 0
        %1410 = vmatprep.subr.bf16.mxu0 0
        %1411 = vmatpush1.bf16.msra.mxu0 0
        %1412 = vmatprep.subr.bf16.mxu0 0
        %1413 = vmatpush1.bf16.msra.mxu0 0
        %1414 = vmatprep.subr.bf16.mxu0 0
        %1415 = vmatpush1.bf16.msra.mxu0 0
        %1416 = vmatprep.subr.bf16.mxu0 0
        %1417 = vmatpush1.bf16.msra.mxu0 0
        %1418 = vmatprep.mubr.bf16.mxu0 0
        %1419 = vmatmul.mubr.bf16.gmra.mrb[0].mxu0 %v1384
        %v1420 = vpop.f32.mrb[0].mxu0
        %v1421 = vadd.f32 0.0, %v1420
        %v1422 = vpop.f32.mrb[0].mxu0
        %v1423 = vpop.f32.mrb[0].mxu0
        %v1424 = vadd.f32 0.0, %v1423
        %v1425 = vpop.f32.mrb[0].mxu0
        %1426 = vdwg.mxu0
        %v1427 = vadd.f32 %v1331, %v1335
        %v1428 = vadd.f32 %v1332, %v1336
        %v1429 = vpack.c.bf16 %v1428, %v1427
        %v1431 = vsel %vm362, %v1429, 0
        %1433 = vmatprep.subr.bf16.mxu0 0
        %1434 = vmatpush1.bf16.msra.mxu0 %v998
        %1435 = vmatprep.subr.bf16.mxu0 0
        %1436 = vmatpush1.bf16.msra.mxu0 0
        %1437 = vmatprep.subr.bf16.mxu0 0
        %1438 = vmatpush1.bf16.msra.mxu0 0
        %1439 = vmatprep.subr.bf16.mxu0 0
        %1440 = vmatpush1.bf16.msra.mxu0 0
        %1441 = vmatprep.subr.bf16.mxu0 0
        %1442 = vmatpush1.bf16.msra.mxu0 0
        %1443 = vmatprep.subr.bf16.mxu0 0
        %1444 = vmatpush1.bf16.msra.mxu0 0
        %1445 = vmatprep.subr.bf16.mxu0 0
        %1446 = vmatpush1.bf16.msra.mxu0 0
        %1447 = vmatprep.subr.bf16.mxu0 0
        %1448 = vmatpush1.bf16.msra.mxu0 0
        %1449 = vmatprep.subr.bf16.mxu0 0
        %1450 = vmatpush1.bf16.msra.mxu0 0
        %1451 = vmatprep.subr.bf16.mxu0 0
        %1452 = vmatpush1.bf16.msra.mxu0 0
        %1453 = vmatprep.subr.bf16.mxu0 0
        %1454 = vmatpush1.bf16.msra.mxu0 0
        %1455 = vmatprep.subr.bf16.mxu0 0
        %1456 = vmatpush1.bf16.msra.mxu0 0
        %1457 = vmatprep.subr.bf16.mxu0 0
        %1458 = vmatpush1.bf16.msra.mxu0 0
        %1459 = vmatprep.subr.bf16.mxu0 0
        %1460 = vmatpush1.bf16.msra.mxu0 0
        %1461 = vmatprep.subr.bf16.mxu0 0
        %1462 = vmatpush1.bf16.msra.mxu0 0
        %1463 = vmatprep.subr.bf16.mxu0 0
        %1464 = vmatpush1.bf16.msra.mxu0 0
        %1465 = vmatprep.mubr.bf16.mxu0 0
        %1466 = vmatmul.mubr.bf16.gmra.mrb[0].mxu0 %v1431
        %v1467 = vpop.f32.mrb[0].mxu0
        %v1468 = vadd.f32 0.0, %v1467
        %v1469 = vpop.f32.mrb[0].mxu0
        %v1470 = vpop.f32.mrb[0].mxu0
        %v1471 = vadd.f32 0.0, %v1470
        %v1472 = vpop.f32.mrb[0].mxu0
        %1473 = vdwg.mxu0
        %v1474 = vsub.f32 %v1376, %v1421
        %v1475 = vsub.f32 %v1379, %v1424
        %v1476 = vsub.f32 %v1468, %v1376
        %v1477 = vsub.f32 %v1471, %v1379
        %v1478 = vsub.f32 %v1476, %v1421
        %v1479 = vsub.f32 %v1477, %v1424
        %s1480 = scalar_lea.vmem %s292, 32 [#allocation2]
        %1481 = vst.msk [vmem:[%s1480] sm:$0xff] %vm362, %v1474
        %1482 = vst.msk [vmem:[%s1480 + $0x8] sm:$0xff] %vm362, %v1475
        %s1483 = scalar_lea.vmem %s292, 48 [#allocation2]
        %1484 = vst.msk [vmem:[%s1483] sm:$0xff] %vm362, %v1478
        %1485 = vst.msk [vmem:[%s1483 + $0x8] sm:$0xff] %vm362, %v1479
        %s1486 = sand.u32 %s186, 1
        %s1487 = scalar_lea.sflag [#allocation3], %s1486
        %s1488 = sand.u32 %s186, 1
        %s1489 = smul.addr %s1488, 64
        %s1490 = scalar_lea.vmem [#allocation2], %s1489
        // Predicated region
        $region49: #{data_consistency_layer.1} parent=47 // pred_check
          %p1491 = pneg %p196
        $region50: #{data_consistency_layer.1} parent=47 // pred_check_branch
          %1493 = sbr.rel (%p1491) target = $region52
        $region51: #{data_consistency_layer.1} parent=47 // pred_region
          %s1494 = smul.u32 2, %s21
          %s1496 = ssub.s32 1024, 1024
          %1497 = vsyncadd %s1487, %s1496
          %s1498 = smul.addr %s1494, 4
          %s1499 = smul.addr %s1498, 128
          %s1500 = scalar_lea.hbm %s7, %s1499
          %s1501 = sshll.u32 %s1490, 4
          %s1502 = int_to_ptr.vmem [resolvable:$true] %s1501
          %1507 = dma.vmem_to_hbm [thread:$0]  %s1502, 1024, %s1500, %s1487, 128, 128, 8
        $region52: #{data_consistency_layer.1} parent=47 // pred_fallthru
          _
      $region48: #{data_consistency_layer.1} parent=5 // pred_fallthru
        _
      %p1508 = scmp.le.s32.totalorder 2, %s16
      // Predicated region
      $region53: #{data_consistency_layer.1} parent=5 // pred_check
        %p1509 = pneg %p1508
      $region54: #{data_consistency_layer.1} parent=5 // pred_check_branch
        %1511 = sbr.rel (%p1509) target = $region56
      $region55: #{data_consistency_layer.1} parent=5 // pred_region
        %s1512 = ssub.s32 %s16, 2
        // Predicated region
        $region57: #{data_consistency_layer.1} parent=55 // pred_check
          %p1513 = pneg %p202
        $region58: #{data_consistency_layer.1} parent=55 // pred_check_branch
          %1515 = sbr.rel (%p1513) target = $region60
        $region59: #{data_consistency_layer.1} parent=55 // pred_region
          %s1516 = sand.u32 %s187, 1
          %s1517 = scalar_lea.sflag [#allocation3], %s1516
          %s1518 = sand.u32 %s187, 1
          %s1519 = smul.addr %s1518, 64
          %s1520 = scalar_lea.vmem [#allocation2], %s1519
          %1521 = dma.done %s1517, 1024
        $region60: #{data_consistency_layer.1} parent=55 // pred_fallthru
          _
      $region56: #{data_consistency_layer.1} parent=5 // pred_fallthru
        _
    $region6: #{data_consistency_layer.1} parent=1 // loop_footer
      %s20 = sadd.s32 1, %s16
    $region7: #{data_consistency_layer.1} parent=1 // loop_footer_branch
      %15 = sbr.rel target = $region3
    $region8: #{data_consistency_layer.1} parent=1 // loop_exit
      _
    %1522 = vsyncpa [#allocation3], 1
    %s1523 = scalar_lea.sflag [#allocation3], 1
    %1524 = vsyncpa %s1523, 1

</llo_original>
